<compile_context>
chip_gen: v7x
topology: tpu7x:2x2x1
jax: 0.10.0
libtpu: 0.0.40
codegen_flags: <defaults>
</compile_context>

<pallas_src>
import functools

import jax
import jax.numpy as jnp
import numpy as np
from jax.experimental import pallas as pl
from jax.experimental.pallas import tpu as pltpu


def _rpn_head_kernel(xc_ref, w1_ref, b1_ref, wh_ref, bh_ref, out_ref, *, A):
    """One (batch, row-tile) grid step.

    xc_ref : (TM, 9*Cin)  bf16   im2col'ed rows (3x3 halo folded in)
    w1_ref : (9*Cin, 512) bf16   folded RPN_Conv weight
    b1_ref : (1, 512)     f32    RPN_Conv bias
    wh_ref : (512, NPAD)  bf16   fused [cls(2A) | bbox(4A) | zero-pad] head weight
    bh_ref : (1, NPAD)    f32    fused head bias (padding lanes are 0)
    out_ref: (TM, NPAD)   f32    [cls_prob(2A) | bbox(4A) | zeros]
    """
    # RPN_Conv (3x3 "same" conv) as a single K = 9*Cin matmul + bias + ReLU.
    conv1 = jnp.dot(xc_ref[...], w1_ref[...], preferred_element_type=jnp.float32)
    conv1 = jnp.maximum(conv1 + b1_ref[...], 0.0)

    # Fused RPN_cls_score + RPN_bbox_pred: one lane-padded (N=128) matmul.
    res = jnp.dot(conv1.astype(wh_ref.dtype), wh_ref[...],
                  preferred_element_type=jnp.float32) + bh_ref[...]

    # Lane-dense store of the whole slab (bbox + zero padding are already
    # final), then overwrite the first 2A columns with the paired softmax.
    out_ref[...] = res

    # Paired softmax: channel a (bg) pairs with channel a + A (fg); this is the
    # PyTorch reshape(.,2) -> softmax(dim=1) -> reshape(.,2A) semantics.
    s0 = res[:, :A]
    s1 = res[:, A:2 * A]
    m = jnp.maximum(s0, s1)
    e0 = jnp.exp(s0 - m)
    e1 = jnp.exp(s1 - m)
    inv = pl.reciprocal(e0 + e1, approx=True)      # EUP slot; frees VALU
    out_ref[:, :A] = e0 * inv
    out_ref[:, A:2 * A] = e1 * inv


def _pick_row_tile(hw, requested=None, target=1024):
    """Row tile over H*W: divides hw and is sublane-aligned (or full extent)."""
    if requested is not None and hw % requested == 0 and (
            requested == hw or requested % 8 == 0):
        return requested
    if hw <= target:
        return hw
    for t in range(target - target % 8, 0, -8):
        if hw % t == 0:
            return t
    return hw


def rpn_forward(base_feat_nchw, params, row_tile=None):
    """Returns (rpn_cls_prob [B,2A,H,W], rpn_bbox_pred [B,4A,H,W], loss_cls, loss_box)."""
    B, Cin, H, W = base_feat_nchw.shape
    mid = params["w1"].shape[-1]
    A = params["wc"].shape[-1] // 2
    HW = H * W
    K9 = 9 * Cin

    # NCHW -> NHWC.  TODO(synk): skip the boundary transposes if downstream
    # (ProposalLayer/NMS) can consume NHWC / (B, H*W, C) directly.
    x = jnp.transpose(base_feat_nchw, (0, 2, 3, 1)).astype(jnp.float32)

    # im2col: (B, H*W, 9*Cin) patches in (dy, dx, cin) tap order.  XLA fuses
    # the pad + 9 slices + concat into one pass over x.
    x_pad = jnp.pad(x, ((0, 0), (1, 1), (1, 1), (0, 0)))
    patches = [x_pad[:, dy:dy + H, dx:dx + W, :]
               for dy in range(3) for dx in range(3)]
    x_col = jnp.concatenate(patches, axis=-1).reshape(B, HW, K9)
    x_col = x_col.astype(jnp.bfloat16)

    # Fold 3x3 HWIO weight into (9*Cin, mid) matching the (dy, dx, cin) order.
    w1 = params["w1"].reshape(K9, mid).astype(jnp.bfloat16)
    b1 = params["b1"].reshape(1, mid).astype(jnp.float32)

    # Fuse cls + bbox heads into one lane-padded weight / bias.
    n_heads = 6 * A
    NPAD = max(128, ((n_heads + 127) // 128) * 128)
    wh = jnp.zeros((mid, NPAD), jnp.float32)
    wh = wh.at[:, :2 * A].set(params["wc"]).at[:, 2 * A:6 * A].set(params["wb"])
    wh = wh.astype(jnp.bfloat16)
    bh = jnp.zeros((1, NPAD), jnp.float32)
    bh = bh.at[:, :2 * A].set(params["bc"].reshape(1, -1))
    bh = bh.at[:, 2 * A:6 * A].set(params["bb"].reshape(1, -1))

    TM = _pick_row_tile(HW, requested=row_tile)
    kernel = functools.partial(_rpn_head_kernel, A=A)

    out_slab = pl.pallas_call(
        kernel,
        out_shape=jax.ShapeDtypeStruct((B, HW, NPAD), jnp.float32),
        grid=(B, HW // TM),
        in_specs=[
            pl.BlockSpec((None, TM, K9), lambda b, t: (b, t, 0)),
            pl.BlockSpec((K9, mid), lambda b, t: (0, 0)),
            pl.BlockSpec((1, mid), lambda b, t: (0, 0)),
            pl.BlockSpec((mid, NPAD), lambda b, t: (0, 0)),
            pl.BlockSpec((1, NPAD), lambda b, t: (0, 0)),
        ],
        out_specs=pl.BlockSpec((None, TM, NPAD), lambda b, t: (b, t, 0)),
        compiler_params=pltpu.CompilerParams(
            dimension_semantics=("parallel", "parallel"),
            vmem_limit_bytes=32 * 1024 * 1024,   # raise v5e's 16 MiB default
        ),
    )(x_col, w1, b1, wh, bh)

    # Split the lane-dense slab and restore NCHW in the wrapper.
    cls_prob_nhwc = out_slab[:, :, :2 * A].reshape(B, H, W, 2 * A)
    bbox_nhwc = out_slab[:, :, 2 * A:6 * A].reshape(B, H, W, 4 * A)
    rpn_cls_prob = jnp.transpose(cls_prob_nhwc, (0, 3, 1, 2))
    rpn_bbox_pred = jnp.transpose(bbox_nhwc, (0, 3, 1, 2))

    # TODO(synk): rois = _ProposalLayer(rpn_cls_prob, rpn_bbox_pred, im_info) not implemented.
    rpn_loss_cls = 0.0
    rpn_loss_box = 0.0
    return rpn_cls_prob, rpn_bbox_pred, rpn_loss_cls, rpn_loss_box


def _reference(base_feat_nchw, params):
    """Plain-JAX f32 reference matching the PyTorch forward (conv/relu/1x1/softmax)."""
    x = jnp.transpose(base_feat_nchw, (0, 2, 3, 1)).astype(jnp.float32)
    conv1 = jax.lax.conv_general_dilated(
        x, params["w1"], window_strides=(1, 1), padding="SAME",
        dimension_numbers=("NHWC", "HWIO", "NHWC"))
    conv1 = jax.nn.relu(conv1 + params["b1"].reshape(1, 1, 1, -1))
    cls = jnp.einsum("bhwc,cd->bhwd", conv1, params["wc"]) + params["bc"].reshape(1, 1, 1, -1)
    bbox = jnp.einsum("bhwc,cd->bhwd", conv1, params["wb"]) + params["bb"].reshape(1, 1, 1, -1)
    B, H, W, C = cls.shape
    A = C // 2
    prob = jax.nn.softmax(cls.reshape(B, H, W, 2, A), axis=3).reshape(B, H, W, C)
    return (jnp.transpose(prob, (0, 3, 1, 2)),
            jnp.transpose(bbox, (0, 3, 1, 2)))


if __name__ == "__main__":
    # Small shapes consistent with the module: din=4 feature map of 16x16, batch 2.
    B, Cin, H, W = 2, 4, 16, 16
    mid = 512                 # RPN_Conv output channels (fixed by the module)
    A = 3 * 3                 # len(ANCHOR_SCALES) * len(ANCHOR_RATIOS) = 9 anchors

    key = jax.random.PRNGKey(0)
    kx, k1, k2, k3, k4, k5, k6 = jax.random.split(key, 7)
    base_feat = jax.random.normal(kx, (B, Cin, H, W), jnp.float32)

    # Deterministic synthetic params (normal_init std=0.01) in HWIO layout;
    # small non-zero biases so the bias path is exercised.
    params = dict(
        w1=0.01 * jax.random.normal(k1, (3, 3, Cin, mid), jnp.float32),
        b1=0.01 * jax.random.normal(k4, (1, mid), jnp.float32),
        wc=0.01 * jax.random.normal(k2, (mid, 2 * A), jnp.float32),
        bc=0.01 * jax.random.normal(k5, (1, 2 * A), jnp.float32),
        wb=0.01 * jax.random.normal(k3, (mid, 4 * A), jnp.float32),
        bb=0.01 * jax.random.normal(k6, (1, 4 * A), jnp.float32),
    )

    # row_tile=128 so the small test exercises the multi-tile spatial grid axis.
    cls_prob, bbox_pred, loss_cls, loss_box = rpn_forward(base_feat, params, row_tile=128)
    jax.block_until_ready((cls_prob, bbox_pred))

    ref_prob, ref_bbox = _reference(base_feat, params)
    # bf16 MXU operands (f32 accumulation) + approx reciprocal -> slightly
    # looser tolerances than the pure-f32 version.
    np.testing.assert_allclose(np.asarray(cls_prob), np.asarray(ref_prob),
                               rtol=2e-2, atol=2e-3)
    np.testing.assert_allclose(np.asarray(bbox_pred), np.asarray(ref_bbox),
                               rtol=2e-2, atol=2e-3)
    print("KERNEL_OK")
</pallas_src>

<mosaic_0001>
module attributes {stable_mosaic.version = 11 : i64} {
  func.func @_rpn_head_kernel(%arg0: i32, %arg1: i32, %arg2: memref<1x128x36xbf16, #tpu.memory_space<vmem>>, %arg3: memref<36x512xbf16, #tpu.memory_space<vmem>>, %arg4: memref<1x512xf32, #tpu.memory_space<vmem>>, %arg5: memref<512x128xbf16, #tpu.memory_space<vmem>>, %arg6: memref<1x128xf32, #tpu.memory_space<vmem>>, %arg7: memref<1x128x128xf32, #tpu.memory_space<vmem>>) attributes {dimension_semantics = [#tpu.dimension_semantics<parallel>, #tpu.dimension_semantics<parallel>], iteration_bounds = array<i64: 2, 2>, scalar_prefetch = 0 : i64, scratch_operands = 0 : i64, tpu.core_type = #tpu.core_type<tc>, window_params = [{transform_indices = @transform_0, window_bounds = array<i64: 1, 128, 36>}, {pipeline_mode = #tpu.pipeline_mode<synchronous>, transform_indices = @transform_1, window_bounds = array<i64: 36, 512>}, {pipeline_mode = #tpu.pipeline_mode<synchronous>, transform_indices = @transform_2, window_bounds = array<i64: 1, 512>}, {pipeline_mode = #tpu.pipeline_mode<synchronous>, transform_indices = @transform_3, window_bounds = array<i64: 512, 128>}, {pipeline_mode = #tpu.pipeline_mode<synchronous>, transform_indices = @transform_4, window_bounds = array<i64: 1, 128>}, {transform_indices = @transform_5, window_bounds = array<i64: 1, 128, 128>}]} {
    %c0 = arith.constant 0 : index
    %c0_0 = arith.constant 0 : index
    %c0_1 = arith.constant 0 : index
    %0 = vector.load %arg2[%c0, %c0_0, %c0_1] : memref<1x128x36xbf16, #tpu.memory_space<vmem>>, vector<1x128x36xbf16>
    %1 = vector.shape_cast %0 : vector<1x128x36xbf16> to vector<128x36xbf16>
    %c0_2 = arith.constant 0 : index
    %c0_3 = arith.constant 0 : index
    %2 = vector.load %arg3[%c0_2, %c0_3] : memref<36x512xbf16, #tpu.memory_space<vmem>>, vector<36x512xbf16>
    %cst = arith.constant dense<0.000000e+00> : vector<128x512xf32>
    %3 = tpu.matmul %1, %2, %cst {dimension_numbers = #tpu.dot_dimension_numbers<[1], [0], [0], [1], [0, 0, 1, 1], [], []>} : vector<128x36xbf16>, vector<36x512xbf16>, vector<128x512xf32> -> vector<128x512xf32>
    %c0_4 = arith.constant 0 : index
    %c0_5 = arith.constant 0 : index
    %4 = vector.load %arg4[%c0_4, %c0_5] : memref<1x512xf32, #tpu.memory_space<vmem>>, vector<1x512xf32>
    %5 = vector.broadcast %4 : vector<1x512xf32> to vector<128x512xf32>
    %6 = arith.addf %3, %5 : vector<128x512xf32>
    %cst_6 = arith.constant 0.000000e+00 : f32
    %7 = vector.broadcast %cst_6 : f32 to vector<128x512xf32>
    %8 = arith.maximumf %6, %7 : vector<128x512xf32>
    %9 = arith.truncf %8 : vector<128x512xf32> to vector<128x512xbf16>
    %c0_7 = arith.constant 0 : index
    %c0_8 = arith.constant 0 : index
    %10 = vector.load %arg5[%c0_7, %c0_8] : memref<512x128xbf16, #tpu.memory_space<vmem>>, vector<512x128xbf16>
    %cst_9 = arith.constant dense<0.000000e+00> : vector<128x128xf32>
    %11 = tpu.matmul %9, %10, %cst_9 {dimension_numbers = #tpu.dot_dimension_numbers<[1], [0], [0], [1], [0, 0, 1, 1], [], []>} : vector<128x512xbf16>, vector<512x128xbf16>, vector<128x128xf32> -> vector<128x128xf32>
    %c0_10 = arith.constant 0 : index
    %c0_11 = arith.constant 0 : index
    %12 = vector.load %arg6[%c0_10, %c0_11] : memref<1x128xf32, #tpu.memory_space<vmem>>, vector<1x128xf32>
    %13 = vector.broadcast %12 : vector<1x128xf32> to vector<128x128xf32>
    %14 = arith.addf %11, %13 : vector<128x128xf32>
    %c0_12 = arith.constant 0 : index
    %c0_13 = arith.constant 0 : index
    %c0_14 = arith.constant 0 : index
    %15 = vector.load %arg7[%c0_12, %c0_13, %c0_14] : memref<1x128x128xf32, #tpu.memory_space<vmem>>, vector<1x128x128xf32>
    %16 = vector.shape_cast %15 : vector<1x128x128xf32> to vector<128x128xf32>
    %17 = vector.shape_cast %14 : vector<128x128xf32> to vector<1x128x128xf32>
    tpu.vector_store %arg7[%c0_12, %c0_13, %c0_14], %17 {strides = array<i32>} : memref<1x128x128xf32, #tpu.memory_space<vmem>>, vector<1x128x128xf32>,
    %18 = vector.extract_strided_slice %14 {offsets = [0, 0], sizes = [128, 9], strides = [1, 1]} : vector<128x128xf32> to vector<128x9xf32>
    %19 = vector.extract_strided_slice %14 {offsets = [0, 9], sizes = [128, 9], strides = [1, 1]} : vector<128x128xf32> to vector<128x9xf32>
    %20 = arith.maximumf %18, %19 : vector<128x9xf32>
    %21 = arith.subf %18, %20 : vector<128x9xf32>
    %22 = math.exp %21 : vector<128x9xf32>
    %23 = arith.subf %19, %20 : vector<128x9xf32>
    %24 = math.exp %23 : vector<128x9xf32>
    %25 = arith.addf %22, %24 : vector<128x9xf32>
    %26 = tpu.reciprocal %25 {approx = true} : vector<128x9xf32> -> vector<128x9xf32>
    %27 = arith.mulf %22, %26 : vector<128x9xf32>
    %c0_15 = arith.constant 0 : index
    %c0_16 = arith.constant 0 : index
    %c0_17 = arith.constant 0 : index
    %28 = vector.load %arg7[%c0_15, %c0_16, %c0_17] : memref<1x128x128xf32, #tpu.memory_space<vmem>>, vector<1x128x9xf32>
    %29 = vector.shape_cast %28 : vector<1x128x9xf32> to vector<128x9xf32>
    %30 = vector.shape_cast %27 : vector<128x9xf32> to vector<1x128x9xf32>
    tpu.vector_store %arg7[%c0_15, %c0_16, %c0_17], %30 {strides = array<i32>} : memref<1x128x128xf32, #tpu.memory_space<vmem>>, vector<1x128x9xf32>,
    %31 = arith.mulf %24, %26 : vector<128x9xf32>
    %c0_18 = arith.constant 0 : index
    %c0_19 = arith.constant 0 : index
    %c9 = arith.constant 9 : index
    %32 = vector.load %arg7[%c0_18, %c0_19, %c9] : memref<1x128x128xf32, #tpu.memory_space<vmem>>, vector<1x128x9xf32>
    %33 = vector.shape_cast %32 : vector<1x128x9xf32> to vector<128x9xf32>
    %34 = vector.shape_cast %31 : vector<128x9xf32> to vector<1x128x9xf32>
    tpu.vector_store %arg7[%c0_18, %c0_19, %c9], %34 {strides = array<i32>} : memref<1x128x128xf32, #tpu.memory_space<vmem>>, vector<1x128x9xf32>,
    return
  }
  func.func @transform_0(%arg0: i32, %arg1: i32) -> (i32, i32, i32) {
    %c0_i32 = arith.constant 0 : i32
    %c0_i32_0 = arith.constant 0 : i32
    return %arg0, %arg1, %c0_i32 : i32, i32, i32
  }
  func.func @transform_1(%arg0: i32, %arg1: i32) -> (i32, i32) {
    %c0_i32 = arith.constant 0 : i32
    %c0_i32_0 = arith.constant 0 : i32
    %c0_i32_1 = arith.constant 0 : i32
    return %c0_i32, %c0_i32_0 : i32, i32
  }
  func.func @transform_2(%arg0: i32, %arg1: i32) -> (i32, i32) {
    %c0_i32 = arith.constant 0 : i32
    %c0_i32_0 = arith.constant 0 : i32
    %c0_i32_1 = arith.constant 0 : i32
    return %c0_i32, %c0_i32_0 : i32, i32
  }
  func.func @transform_3(%arg0: i32, %arg1: i32) -> (i32, i32) {
    %c0_i32 = arith.constant 0 : i32
    %c0_i32_0 = arith.constant 0 : i32
    %c0_i32_1 = arith.constant 0 : i32
    return %c0_i32, %c0_i32_0 : i32, i32
  }
  func.func @transform_4(%arg0: i32, %arg1: i32) -> (i32, i32) {
    %c0_i32 = arith.constant 0 : i32
    %c0_i32_0 = arith.constant 0 : i32
    %c0_i32_1 = arith.constant 0 : i32
    return %c0_i32, %c0_i32_0 : i32, i32
  }
  func.func @transform_5(%arg0: i32, %arg1: i32) -> (i32, i32, i32) {
    %c0_i32 = arith.constant 0 : i32
    %c0_i32_0 = arith.constant 0 : i32
    return %arg0, %arg1, %c0_i32 : i32, i32, i32
  }
}

</mosaic_0001>

<llo_original>
// kernel: tpu_custom_call.1
$region0: #{tpu_custom_call.1}
  #allocation0 [shape = 'u32[]', space=smem, size = 0x4, offset = 0x4, fixed_abs, tag = 'smem constant byte address 0x4 - core index']
  #allocation1 [shape = 'u32[144,128]{1,0:T(1,128)}', space=vmem, size = 0x12000, scoped, tag = 'internal scratch']
  %s0 = inlined_call_operand.vmem [shape: bf16[2,256,36], index: 0, kind: input, shape index: {}]
  %s1 = inlined_call_operand.vmem [shape: bf16[36,512], index: 1, kind: input, shape index: {}]
  %s2 = inlined_call_operand.hbm [shape: f32[1,512], index: 2, kind: input, shape index: {}]
  %s3 = inlined_call_operand.vmem [shape: bf16[512,128], index: 3, kind: input, shape index: {}]
  %s4 = inlined_call_operand.vmem [shape: f32[1,128], index: 4, kind: input, shape index: {}]
  %s5 = inlined_call_operand.hbm [shape: f32[2,256,128], index: 5, kind: output, shape index: {}]
  %s6 = sld [smem:[#allocation0]]
  $region57: #{tpu_custom_call.1} parent=0
    _
  %s8 = ssub.s32 1, %s6
  %s9 = scalar_select 0, %s8, %s6
  $region1: #{tpu_custom_call.1} parent=0
    #allocation2 [shape = 'u8[2048]{0}', space=vmem, size = 0x800, scoped, tag = 'input window, operand 2, single buffered']
    #allocation3 [shape = 's32[2]{0}', space=sflag, size = 0x8, scoped, tag = 'scoped memory for tpu_custom_call.1']
    #allocation4 [shape = 's32[2]{0}', space=sflag, size = 0x8, scoped, tag = 'scoped memory for tpu_custom_call.1']
    #allocation5 [shape = 'u8[131072]{0}', space=vmem, size = 0x20000, scoped, tag = 'output window, operand 0']
    %10 = vsyncpa [#allocation3], 0
    %11 = vsyncpa [#allocation4], 0
    %s12 = scalar_lea.sflag [#allocation4], 1
    %13 = vsyncpa %s12, 0
    loop: start=0, step=1, limit=6
    $region2: #{tpu_custom_call.1} parent=1 // loop_pre_header
      _
    $region3: #{tpu_custom_call.1} parent=1 // loop_header
      %s15 = sphi 0, %s19
      %p16 = scmp.ge.s32.totalorder %s15, 6
      %s22 = sphi 0, %s34
      %s23 = sphi 0, %s30
      %s24 = sphi 0, %s22
      %s25 = sphi 0, %s23
      %s26 = sphi 0, %s24
      %s27 = sphi 0, %s25
      %s39 = sphi 0, %s41
      %s42 = sphi 0, %s39
      %s43 = sphi 0, %s42
      %s59 = sphi 0, %s43
      %s63 = sphi 0, %s63
      %s65 = sphi 0, %s63
      %s66 = sphi 0, %s65
      %s80 = sphi 0, %s66
      %s84 = sphi 0, %s84
      %s86 = sphi 0, %s84
      %s87 = sphi 0, %s86
      %s101 = sphi 0, %s87
      %s105 = sphi 0, %s105
      %s107 = sphi 0, %s105
      %s108 = sphi 0, %s107
      %s122 = sphi 0, %s108
      %s126 = sphi 0, %s126
      %s128 = sphi 0, %s126
      %s129 = sphi 0, %s128
      %s143 = sphi 0, %s129
      %s151 = sphi 0, %s153
      %s154 = sphi 0, %s151
      %s155 = sphi 0, %s154
      %s171 = sphi 0, %s155
    $region4: #{tpu_custom_call.1} parent=1 // loop_header_branch
      %18 = sbr.rel (%p16) target = $region8
    $region5: #{tpu_custom_call.1} parent=1 // loop_body
      %s20 = ssub.s32 %s15, 1
      %s21 = ssub.s32 %s15, 2
      %s28 = sadd.s32 1, %s23
      %p29 = scmp.ge.s32.totalorder %s28, 2
      %s30 = scalar_select %p29, 0, %s28
      %s31 = sadd.s32 1, %s22
      %s32 = scalar_select %p29, %s31, %s22
      %p33 = scmp.ge.s32.totalorder %s32, 2
      %s34 = scalar_select %p33, 0, %s32
      %s35 = ssub.s32 %s22, %s34
      %s36 = ssub.s32 %s23, %s30
      %s37 = sor.u32 %s35, %s36
      %p38 = scmp.eq.s32.totalorder %s37, 0
      %s40 = sadd.s32 %s39, 1
      %s41 = scalar_select %p38, %s39, %s40
      %p44 = pneg %p38
      %p45 = scmp.eq.s32.totalorder %s15, 3
      %p46 = por %p44, %p45
      %p47 = scmp.ne.s32.totalorder %s39, %s42
      %p48 = scmp.eq.s32.totalorder %s15, 0
      %p49 = por %p47, %p48
      %p50 = scmp.ne.s32.totalorder %s39, %s42
      %p51 = scmp.eq.s32.totalorder %s20, 3
      %p52 = por %p50, %p51
      %p53 = scmp.ne.s32.totalorder %s42, %s43
      %p54 = scmp.eq.s32.totalorder %s20, 0
      %p55 = por %p53, %p54
      %p56 = scmp.ne.s32.totalorder %s42, %s43
      %p57 = scmp.eq.s32.totalorder %s21, 3
      %p58 = por %p56, %p57
      %p60 = scmp.ne.s32.totalorder %s43, %s59
      %p61 = scmp.eq.s32.totalorder %s21, 0
      %p62 = por %p60, %p61
      %s64 = sadd.s32 %s63, 1
      %p67 = scmp.eq.s32.totalorder %s15, 3
      %p68 = scmp.ne.s32.totalorder %s63, %s65
      %p69 = scmp.eq.s32.totalorder %s15, 0
      %p70 = por %p68, %p69
      %p71 = scmp.ne.s32.totalorder %s63, %s65
      %p72 = scmp.eq.s32.totalorder %s20, 3
      %p73 = por %p71, %p72
      %p74 = scmp.ne.s32.totalorder %s65, %s66
      %p75 = scmp.eq.s32.totalorder %s20, 0
      %p76 = por %p74, %p75
      %p77 = scmp.ne.s32.totalorder %s65, %s66
      %p78 = scmp.eq.s32.totalorder %s21, 3
      %p79 = por %p77, %p78
      %p81 = scmp.ne.s32.totalorder %s66, %s80
      %p82 = scmp.eq.s32.totalorder %s21, 0
      %p83 = por %p81, %p82
      %s85 = sadd.s32 %s84, 1
      %p88 = scmp.eq.s32.totalorder %s15, 3
      %p89 = scmp.ne.s32.totalorder %s84, %s86
      %p90 = scmp.eq.s32.totalorder %s15, 0
      %p91 = por %p89, %p90
      %p92 = scmp.ne.s32.totalorder %s84, %s86
      %p93 = scmp.eq.s32.totalorder %s20, 3
      %p94 = por %p92, %p93
      %p95 = scmp.ne.s32.totalorder %s86, %s87
      %p96 = scmp.eq.s32.totalorder %s20, 0
      %p97 = por %p95, %p96
      %p98 = scmp.ne.s32.totalorder %s86, %s87
      %p99 = scmp.eq.s32.totalorder %s21, 3
      %p100 = por %p98, %p99
      %p102 = scmp.ne.s32.totalorder %s87, %s101
      %p103 = scmp.eq.s32.totalorder %s21, 0
      %p104 = por %p102, %p103
      %s106 = sadd.s32 %s105, 1
      %p109 = scmp.eq.s32.totalorder %s15, 3
      %p110 = scmp.ne.s32.totalorder %s105, %s107
      %p111 = scmp.eq.s32.totalorder %s15, 0
      %p112 = por %p110, %p111
      %p113 = scmp.ne.s32.totalorder %s105, %s107
      %p114 = scmp.eq.s32.totalorder %s20, 3
      %p115 = por %p113, %p114
      %p116 = scmp.ne.s32.totalorder %s107, %s108
      %p117 = scmp.eq.s32.totalorder %s20, 0
      %p118 = por %p116, %p117
      %p119 = scmp.ne.s32.totalorder %s107, %s108
      %p120 = scmp.eq.s32.totalorder %s21, 3
      %p121 = por %p119, %p120
      %p123 = scmp.ne.s32.totalorder %s108, %s122
      %p124 = scmp.eq.s32.totalorder %s21, 0
      %p125 = por %p123, %p124
      %s127 = sadd.s32 %s126, 1
      %p130 = scmp.eq.s32.totalorder %s15, 3
      %p131 = scmp.ne.s32.totalorder %s126, %s128
      %p132 = scmp.eq.s32.totalorder %s15, 0
      %p133 = por %p131, %p132
      %p134 = scmp.ne.s32.totalorder %s126, %s128
      %p135 = scmp.eq.s32.totalorder %s20, 3
      %p136 = por %p134, %p135
      %p137 = scmp.ne.s32.totalorder %s128, %s129
      %p138 = scmp.eq.s32.totalorder %s20, 0
      %p139 = por %p137, %p138
      %p140 = scmp.ne.s32.totalorder %s128, %s129
      %p141 = scmp.eq.s32.totalorder %s21, 3
      %p142 = por %p140, %p141
      %p144 = scmp.ne.s32.totalorder %s129, %s143
      %p145 = scmp.eq.s32.totalorder %s21, 0
      %p146 = por %p144, %p145
      %s147 = ssub.s32 %s22, %s34
      %s148 = ssub.s32 %s23, %s30
      %s149 = sor.u32 %s147, %s148
      %p150 = scmp.eq.s32.totalorder %s149, 0
      %s152 = sadd.s32 %s151, 1
      %s153 = scalar_select %p150, %s151, %s152
      %p156 = pneg %p150
      %p157 = scmp.eq.s32.totalorder %s15, 3
      %p158 = por %p156, %p157
      %p159 = scmp.ne.s32.totalorder %s151, %s154
      %p160 = scmp.eq.s32.totalorder %s15, 0
      %p161 = por %p159, %p160
      %p162 = scmp.ne.s32.totalorder %s151, %s154
      %p163 = scmp.eq.s32.totalorder %s20, 3
      %p164 = por %p162, %p163
      %p165 = scmp.ne.s32.totalorder %s154, %s155
      %p166 = scmp.eq.s32.totalorder %s20, 0
      %p167 = por %p165, %p166
      %p168 = scmp.ne.s32.totalorder %s154, %s155
      %p169 = scmp.eq.s32.totalorder %s21, 3
      %p170 = por %p168, %p169
      %p172 = scmp.ne.s32.totalorder %s155, %s171
      %p173 = scmp.eq.s32.totalorder %s21, 0
      %p174 = por %p172, %p173
      %p175 = scmp.le.s32.totalorder 1, %s15
      %p176 = scmp.lt.s32.totalorder %s15, 5
      %p177 = pnand %p175, %p176
      %p178 = pneg %p177
      // Predicated region
      $region9: #{tpu_custom_call.1} parent=5 // pred_check
        _
      $region10: #{tpu_custom_call.1} parent=5 // pred_check_branch
        %180 = sbr.rel (%p177) target = $region12
      $region11: #{tpu_custom_call.1} parent=5 // pred_region
        %s181 = ssub.s32 %s15, 1
        // Predicated region
        $region13: #{tpu_custom_call.1} parent=11 // pred_check
          %p182 = pneg %p76
        $region14: #{tpu_custom_call.1} parent=11 // pred_check_branch
          %184 = sbr.rel (%p182) target = $region16
        $region15: #{tpu_custom_call.1} parent=11 // pred_region
          _
        $region16: #{tpu_custom_call.1} parent=11 // pred_fallthru
          _
        // Predicated region
        $region17: #{tpu_custom_call.1} parent=11 // pred_check
          %p185 = pneg %p97
        $region18: #{tpu_custom_call.1} parent=11 // pred_check_branch
          %187 = sbr.rel (%p185) target = $region20
        $region19: #{tpu_custom_call.1} parent=11 // pred_region
          %s189 = ssub.s32 64, 64
          %190 = vsyncadd [#allocation3], %s189
          %s192 = sshll.u32 [#allocation2], 4
          %s193 = int_to_ptr.vmem [resolvable:$true] %s192
          %195 = dma.hbm_to_vmem [thread:$0]  %s2, 64, %s193, [#allocation3]
        $region20: #{tpu_custom_call.1} parent=11 // pred_fallthru
          _
        // Predicated region
        $region21: #{tpu_custom_call.1} parent=11 // pred_check
          %p196 = pneg %p118
        $region22: #{tpu_custom_call.1} parent=11 // pred_check_branch
          %198 = sbr.rel (%p196) target = $region24
        $region23: #{tpu_custom_call.1} parent=11 // pred_region
          _
        $region24: #{tpu_custom_call.1} parent=11 // pred_fallthru
          _
        // Predicated region
        $region25: #{tpu_custom_call.1} parent=11 // pred_check
          %p199 = pneg %p139
        $region26: #{tpu_custom_call.1} parent=11 // pred_check_branch
          %201 = sbr.rel (%p199) target = $region28
        $region27: #{tpu_custom_call.1} parent=11 // pred_region
          _
        $region28: #{tpu_custom_call.1} parent=11 // pred_fallthru
          _
      $region12: #{tpu_custom_call.1} parent=5 // pred_fallthru
        _
      %p202 = scmp.lt.s32.totalorder %s15, 4
      // Predicated region
      $region29: #{tpu_custom_call.1} parent=5 // pred_check
        %p203 = pneg %p202
      $region30: #{tpu_custom_call.1} parent=5 // pred_check_branch
        %205 = sbr.rel (%p203) target = $region32
      $region31: #{tpu_custom_call.1} parent=5 // pred_region
        // Predicated region
        $region33: #{tpu_custom_call.1} parent=31 // pred_check
          %p206 = pneg %p49
        $region34: #{tpu_custom_call.1} parent=31 // pred_check_branch
          %208 = sbr.rel (%p206) target = $region36
        $region35: #{tpu_custom_call.1} parent=31 // pred_region
          %s209 = smul.u32 16, %s23
          %p210 = scmp.lt.s32.totalorder %s22, 1
          %s211 = scalar_select %p210, %s22, 1
          %p212 = scmp.lt.s32.totalorder %s209, 31
          %s213 = scalar_select %p212, %s209, 31
          %s214 = smul.addr %s211, 32
          %s215 = sadd.s32 %s213, %s214
          %s216 = smul.addr %s215, 4
          %s217 = scalar_lea.vmem %s0, %s216
          %s218 = smul.u32 16, %s23
        $region36: #{tpu_custom_call.1} parent=31 // pred_fallthru
          _
      $region32: #{tpu_custom_call.1} parent=5 // pred_fallthru
        _
      %p219 = scmp.le.s32.totalorder 1, %s15
      %p220 = scmp.lt.s32.totalorder %s15, 5
      %p221 = pnand %p219, %p220
      %p222 = pneg %p221
      // Predicated region
      $region37: #{tpu_custom_call.1} parent=5 // pred_check
        _
      $region38: #{tpu_custom_call.1} parent=5 // pred_check_branch
        %224 = sbr.rel (%p221) target = $region40
      $region39: #{tpu_custom_call.1} parent=5 // pred_region
        %s225 = ssub.s32 %s15, 1
        // Predicated region
        $region41: #{tpu_custom_call.1} parent=39 // pred_check
          %p226 = pneg %p97
        $region42: #{tpu_custom_call.1} parent=39 // pred_check_branch
          %228 = sbr.rel (%p226) target = $region44
        $region43: #{tpu_custom_call.1} parent=39 // pred_region
          %229 = dma.done [#allocation3], 64
        $region44: #{tpu_custom_call.1} parent=39 // pred_fallthru
          _
        %s230 = smul.u32 16, %s25
        %p231 = scmp.lt.s32.totalorder %s24, 1
        %s232 = scalar_select %p231, %s24, 1
        %p233 = scmp.lt.s32.totalorder %s230, 31
        %s234 = scalar_select %p233, %s230, 31
        %s235 = smul.addr %s232, 32
        %s236 = sadd.s32 %s234, %s235
        %s237 = smul.addr %s236, 4
        %s238 = scalar_lea.vmem %s0, %s237
        %p239 = pneg %p55
        %p240 = pneg %p52
        %p241 = pneg %p76
        %p242 = pneg %p73
        %p243 = pneg %p97
        %p244 = pneg %p94
        %p245 = pneg %p118
        %p246 = pneg %p115
        %p247 = pneg %p139
        %p248 = pneg %p136
        %p249 = pneg %p167
        %p250 = pneg %p164
        %s251 = sand.u32 %s154, 1
        %s252 = scalar_lea.sflag [#allocation4], %s251
        %s253 = sand.u32 %s154, 1
        %s254 = smul.addr %s253, 128
        %s255 = scalar_lea.vmem [#allocation5], %s254
        %s256 = smul.u32 16, %s25
        %p257 = scmp.lt.s32.totalorder %s24, 1
        %s258 = scalar_select %p257, %s24, 1
        %p259 = scmp.lt.s32.totalorder %s256, 31
        %s260 = scalar_select %p259, %s256, 31
        %s261 = smul.addr %s258, 32
        %s262 = sadd.s32 %s260, %s261
        %s263 = smul.addr %s262, 4
        %s264 = scalar_lea.vmem %s0, %s263
        %s265 = smul.u32 16, %s25
        %s266 = smul.u32 16, %s25
        %v268 = vld [vmem:[%s264] sm:$0xf]
        %v269 = vld [vmem:[%s264 + $0x4] sm:$0xf]
        %v270 = vld [vmem:[%s264 + $0x8] sm:$0xf]
        %v271 = vld [vmem:[%s264 + $0xc] sm:$0xf]
        %v272 = vld [vmem:[%s264 + $0x10] sm:$0xf]
        %v273 = vld [vmem:[%s264 + $0x14] sm:$0xf]
        %v274 = vld [vmem:[%s264 + $0x18] sm:$0xf]
        %v275 = vld [vmem:[%s264 + $0x1c] sm:$0xf]
        %v276 = vld [vmem:[%s264 + $0x20] sm:$0xf]
        %v277 = vld [vmem:[%s264 + $0x24] sm:$0xf]
        %v278 = vld [vmem:[%s264 + $0x28] sm:$0xf]
        %v279 = vld [vmem:[%s264 + $0x2c] sm:$0xf]
        %v280 = vld [vmem:[%s264 + $0x30] sm:$0xf]
        %v281 = vld [vmem:[%s264 + $0x34] sm:$0xf]
        %v282 = vld [vmem:[%s264 + $0x38] sm:$0xf]
        %v283 = vld [vmem:[%s264 + $0x3c] sm:$0xf]
        %v284 = vld [vmem:[%s1] sm:$0xff]
        %v285 = vld [vmem:[%s1 + $0x8] sm:$0xff]
        %v286 = vld [vmem:[%s1 + $0x10] sm:$0xff]
        %v287 = vld [vmem:[%s1 + $0x18] sm:$0xff]
        %v288 = vld [vmem:[%s1 + $0x20] sm:$0xff]
        %v289 = vld [vmem:[%s1 + $0x28] sm:$0xff]
        %v290 = vld [vmem:[%s1 + $0x30] sm:$0xff]
        %v291 = vld [vmem:[%s1 + $0x38] sm:$0xff]
        %v292 = vld [vmem:[%s1 + $0x40] sm:$0x33]
        %v293 = vld [vmem:[%s1 + $0x48] sm:$0x33]
        %v294 = vld [vmem:[#allocation2] sm:$0xf]
        %v296 = vlaneseq
        %v297 = vshrl.u32 %v296, 7
        %v298 = vsub.s32 0, %v297
        %v299 = vrot.slane %v294, %v298
        %v300 = vlaneseq
        %v301 = vshrl.u32 %v300, 7
        %v302 = vsub.s32 1, %v301
        %v303 = vrot.slane %v294, %v302
        %v304 = vlaneseq
        %v305 = vshrl.u32 %v304, 7
        %v306 = vsub.s32 2, %v305
        %v307 = vrot.slane %v294, %v306
        %v308 = vlaneseq
        %v309 = vshrl.u32 %v308, 7
        %v310 = vsub.s32 3, %v309
        %v311 = vrot.slane %v294, %v310
        %v332 = vunpack.c.l.b16 %v268
        %v333 = vunpack.c.l.b16 %v269
        %v334 = vunpack.c.l.b16 %v270
        %v335 = vunpack.c.l.b16 %v271
        %v336 = vunpack.c.l.b16 %v272
        %v337 = vunpack.c.l.b16 %v273
        %v338 = vunpack.c.l.b16 %v274
        %v339 = vunpack.c.l.b16 %v275
        %v340 = vunpack.c.l.b16 %v276
        %v341 = vunpack.c.l.b16 %v277
        %v342 = vunpack.c.l.b16 %v278
        %v343 = vunpack.c.l.b16 %v279
        %v344 = vunpack.c.l.b16 %v280
        %v345 = vunpack.c.l.b16 %v281
        %v346 = vunpack.c.l.b16 %v282
        %v347 = vunpack.c.l.b16 %v283
        %v348 = vpack.c.b16 %v333, %v332
        %v349 = vpack.c.b16 %v335, %v334
        %v350 = vpack.c.b16 %v337, %v336
        %v351 = vpack.c.b16 %v339, %v338
        %v352 = vpack.c.b16 %v341, %v340
        %v353 = vpack.c.b16 %v343, %v342
        %v354 = vpack.c.b16 %v345, %v344
        %v355 = vpack.c.b16 %v347, %v346
        %v366 = vunpack.c.l.b16 %v284
        %v367 = vunpack.c.h.b16 %v284
        %v368 = vunpack.c.l.b16 %v285
        %v369 = vunpack.c.h.b16 %v285
        %v370 = vunpack.c.l.b16 %v286
        %v371 = vunpack.c.h.b16 %v286
        %v372 = vunpack.c.l.b16 %v287
        %v373 = vunpack.c.h.b16 %v287
        %v374 = vunpack.c.l.b16 %v288
        %v375 = vunpack.c.h.b16 %v288
        %v376 = vunpack.c.l.b16 %v289
        %v377 = vunpack.c.h.b16 %v289
        %v378 = vunpack.c.l.b16 %v290
        %v379 = vunpack.c.h.b16 %v290
        %v380 = vunpack.c.l.b16 %v291
        %v381 = vunpack.c.h.b16 %v291
        %v382 = vunpack.c.l.b16 %v292
        %v383 = vunpack.c.h.b16 %v292
        %v384 = vunpack.c.l.b16 %v293
        %v385 = vunpack.c.h.b16 %v293
        %v386 = vpack.c.b16 %v370, %v366
        %v387 = vpack.c.b16 %v371, %v367
        %v388 = vpack.c.b16 %v372, %v368
        %v389 = vpack.c.b16 %v373, %v369
        %v390 = vpack.c.b16 %v378, %v374
        %v391 = vpack.c.b16 %v379, %v375
        %v392 = vpack.c.b16 %v380, %v376
        %v393 = vpack.c.b16 %v381, %v377
        %v394 = vpack.c.b16 %v382, %v382
        %v395 = vpack.c.b16 %v383, %v383
        %v396 = vpack.c.b16 %v384, %v384
        %v397 = vpack.c.b16 %v385, %v385
        %vm406 = vcmask 293888
        %v408 = vsel %vm406, %v348, 0
        %v411 = vsel %vm406, %v349, 0
        %v414 = vsel %vm406, %v350, 0
        %v417 = vsel %vm406, %v351, 0
        %v420 = vsel %vm406, %v352, 0
        %v423 = vsel %vm406, %v353, 0
        %v426 = vsel %vm406, %v354, 0
        %v429 = vsel %vm406, %v355, 0
        %vm431 = vcmask 1041408
        %v433 = vsel %vm431, %v394, 0
        %v436 = vsel %vm431, %v395, 0
        %v439 = vsel %vm431, %v396, 0
        %v442 = vsel %vm431, %v397, 0
        %444 = vmatprep.subr.bf16.mxu0 %v387
        %445 = vmatpush1.bf16.msra.mxu0 %v386
        %446 = vmatprep.subr.bf16.mxu0 %v391
        %447 = vmatpush1.bf16.msra.mxu0 %v390
        %448 = vmatprep.subr.bf16.mxu0 %v436
        %449 = vmatpush1.bf16.msra.mxu0 %v433
        %450 = vmatprep.subr.bf16.mxu0 0
        %451 = vmatpush1.bf16.msra.mxu0 0
        %452 = vmatprep.subr.bf16.mxu0 0
        %453 = vmatpush1.bf16.msra.mxu0 0
        %454 = vmatprep.subr.bf16.mxu0 0
        %455 = vmatpush1.bf16.msra.mxu0 0
        %456 = vmatprep.subr.bf16.mxu0 0
        %457 = vmatpush1.bf16.msra.mxu0 0
        %458 = vmatprep.subr.bf16.mxu0 0
        %459 = vmatpush1.bf16.msra.mxu0 0
        %460 = vmatprep.subr.bf16.mxu0 0
        %461 = vmatpush1.bf16.msra.mxu0 0
        %462 = vmatprep.subr.bf16.mxu0 0
        %463 = vmatpush1.bf16.msra.mxu0 0
        %464 = vmatprep.subr.bf16.mxu0 0
        %465 = vmatpush1.bf16.msra.mxu0 0
        %466 = vmatprep.subr.bf16.mxu0 0
        %467 = vmatpush1.bf16.msra.mxu0 0
        %468 = vmatprep.subr.bf16.mxu0 0
        %469 = vmatpush1.bf16.msra.mxu0 0
        %470 = vmatprep.subr.bf16.mxu0 0
        %471 = vmatpush1.bf16.msra.mxu0 0
        %472 = vmatprep.subr.bf16.mxu0 0
        %473 = vmatpush1.bf16.msra.mxu0 0
        %474 = vmatprep.subr.bf16.mxu0 0
        %475 = vmatpush1.bf16.msra.mxu0 0
        %476 = vmatprep.mubr.bf16.mxu0 0
        %477 = vmatmul.mubr.bf16.gmra.mrb[0].mxu0 %v408
        %v478 = vpop.f32.mrb[0].mxu0
        %v479 = vadd.f32 %v299, %v478
        %v480 = vpop.f32.mrb[0].mxu0
        %v481 = vadd.f32 %v303, %v480
        %v482 = vpop.f32.mrb[0].mxu0
        %v483 = vadd.f32 %v299, %v482
        %v484 = vpop.f32.mrb[0].mxu0
        %v485 = vadd.f32 %v303, %v484
        %486 = vmatprep.mubr.bf16.mxu0 0
        %487 = vmatmul.mubr.bf16.gmra.mrb[0].mxu0 %v411
        %v488 = vpop.f32.mrb[0].mxu0
        %v489 = vadd.f32 %v299, %v488
        %v490 = vpop.f32.mrb[0].mxu0
        %v491 = vadd.f32 %v303, %v490
        %v492 = vpop.f32.mrb[0].mxu0
        %v493 = vadd.f32 %v299, %v492
        %v494 = vpop.f32.mrb[0].mxu0
        %v495 = vadd.f32 %v303, %v494
        %496 = vmatprep.mubr.bf16.mxu0 0
        %497 = vmatmul.mubr.bf16.gmra.mrb[0].mxu0 %v414
        %v498 = vpop.f32.mrb[0].mxu0
        %v499 = vadd.f32 %v299, %v498
        %v500 = vpop.f32.mrb[0].mxu0
        %v501 = vadd.f32 %v303, %v500
        %v502 = vpop.f32.mrb[0].mxu0
        %v503 = vadd.f32 %v299, %v502
        %v504 = vpop.f32.mrb[0].mxu0
        %v505 = vadd.f32 %v303, %v504
        %506 = vmatprep.mubr.bf16.mxu0 0
        %507 = vmatmul.mubr.bf16.gmra.mrb[0].mxu0 %v417
        %v508 = vpop.f32.mrb[0].mxu0
        %v509 = vadd.f32 %v299, %v508
        %v510 = vpop.f32.mrb[0].mxu0
        %v511 = vadd.f32 %v303, %v510
        %v512 = vpop.f32.mrb[0].mxu0
        %v513 = vadd.f32 %v299, %v512
        %v514 = vpop.f32.mrb[0].mxu0
        %v515 = vadd.f32 %v303, %v514
        %516 = vmatprep.mubr.bf16.mxu0 0
        %517 = vmatmul.mubr.bf16.gmra.mrb[0].mxu0 %v420
        %v518 = vpop.f32.mrb[0].mxu0
        %v519 = vadd.f32 %v299, %v518
        %v520 = vpop.f32.mrb[0].mxu0
        %v521 = vadd.f32 %v303, %v520
        %v522 = vpop.f32.mrb[0].mxu0
        %v523 = vadd.f32 %v299, %v522
        %v524 = vpop.f32.mrb[0].mxu0
        %v525 = vadd.f32 %v303, %v524
        %526 = vmatprep.mubr.bf16.mxu0 0
        %527 = vmatmul.mubr.bf16.gmra.mrb[0].mxu0 %v423
        %v528 = vpop.f32.mrb[0].mxu0
        %v529 = vadd.f32 %v299, %v528
        %v530 = vpop.f32.mrb[0].mxu0
        %v531 = vadd.f32 %v303, %v530
        %v532 = vpop.f32.mrb[0].mxu0
        %v533 = vadd.f32 %v299, %v532
        %v534 = vpop.f32.mrb[0].mxu0
        %v535 = vadd.f32 %v303, %v534
        %536 = vmatprep.mubr.bf16.mxu0 0
        %537 = vmatmul.mubr.bf16.gmra.mrb[0].mxu0 %v426
        %v538 = vpop.f32.mrb[0].mxu0
        %v539 = vadd.f32 %v299, %v538
        %v540 = vpop.f32.mrb[0].mxu0
        %v541 = vadd.f32 %v303, %v540
        %v542 = vpop.f32.mrb[0].mxu0
        %v543 = vadd.f32 %v299, %v542
        %v544 = vpop.f32.mrb[0].mxu0
        %v545 = vadd.f32 %v303, %v544
        %546 = vmatprep.mubr.bf16.mxu0 0
        %547 = vmatmul.mubr.bf16.gmra.mrb[0].mxu0 %v429
        %v548 = vpop.f32.mrb[0].mxu0
        %v549 = vadd.f32 %v299, %v548
        %v550 = vpop.f32.mrb[0].mxu0
        %v551 = vadd.f32 %v303, %v550
        %v552 = vpop.f32.mrb[0].mxu0
        %v553 = vadd.f32 %v299, %v552
        %v554 = vpop.f32.mrb[0].mxu0
        %v555 = vadd.f32 %v303, %v554
        %556 = vdwg.mxu0
        %557 = vmatprep.subr.bf16.mxu0 %v389
        %558 = vmatpush1.bf16.msra.mxu0 %v388
        %559 = vmatprep.subr.bf16.mxu0 %v393
        %560 = vmatpush1.bf16.msra.mxu0 %v392
        %561 = vmatprep.subr.bf16.mxu0 %v442
        %562 = vmatpush1.bf16.msra.mxu0 %v439
        %563 = vmatprep.subr.bf16.mxu0 0
        %564 = vmatpush1.bf16.msra.mxu0 0
        %565 = vmatprep.subr.bf16.mxu0 0
        %566 = vmatpush1.bf16.msra.mxu0 0
        %567 = vmatprep.subr.bf16.mxu0 0
        %568 = vmatpush1.bf16.msra.mxu0 0
        %569 = vmatprep.subr.bf16.mxu0 0
        %570 = vmatpush1.bf16.msra.mxu0 0
        %571 = vmatprep.subr.bf16.mxu0 0
        %572 = vmatpush1.bf16.msra.mxu0 0
        %573 = vmatprep.subr.bf16.mxu0 0
        %574 = vmatpush1.bf16.msra.mxu0 0
        %575 = vmatprep.subr.bf16.mxu0 0
        %576 = vmatpush1.bf16.msra.mxu0 0
        %577 = vmatprep.subr.bf16.mxu0 0
        %578 = vmatpush1.bf16.msra.mxu0 0
        %579 = vmatprep.subr.bf16.mxu0 0
        %580 = vmatpush1.bf16.msra.mxu0 0
        %581 = vmatprep.subr.bf16.mxu0 0
        %582 = vmatpush1.bf16.msra.mxu0 0
        %583 = vmatprep.subr.bf16.mxu0 0
        %584 = vmatpush1.bf16.msra.mxu0 0
        %585 = vmatprep.subr.bf16.mxu0 0
        %586 = vmatpush1.bf16.msra.mxu0 0
        %587 = vmatprep.subr.bf16.mxu0 0
        %588 = vmatpush1.bf16.msra.mxu0 0
        %589 = vmatprep.mubr.bf16.mxu0 0
        %590 = vmatmul.mubr.bf16.gmra.mrb[0].mxu0 %v408
        %v591 = vpop.f32.mrb[0].mxu0
        %v592 = vadd.f32 %v307, %v591
        %v593 = vpop.f32.mrb[0].mxu0
        %v594 = vadd.f32 %v311, %v593
        %v595 = vpop.f32.mrb[0].mxu0
        %v596 = vadd.f32 %v307, %v595
        %v597 = vpop.f32.mrb[0].mxu0
        %v598 = vadd.f32 %v311, %v597
        %599 = vmatprep.mubr.bf16.mxu0 0
        %600 = vmatmul.mubr.bf16.gmra.mrb[0].mxu0 %v411
        %v601 = vpop.f32.mrb[0].mxu0
        %v602 = vadd.f32 %v307, %v601
        %v603 = vpop.f32.mrb[0].mxu0
        %v604 = vadd.f32 %v311, %v603
        %v605 = vpop.f32.mrb[0].mxu0
        %v606 = vadd.f32 %v307, %v605
        %v607 = vpop.f32.mrb[0].mxu0
        %v608 = vadd.f32 %v311, %v607
        %609 = vmatprep.mubr.bf16.mxu0 0
        %610 = vmatmul.mubr.bf16.gmra.mrb[0].mxu0 %v414
        %v611 = vpop.f32.mrb[0].mxu0
        %v612 = vadd.f32 %v307, %v611
        %v613 = vpop.f32.mrb[0].mxu0
        %v614 = vadd.f32 %v311, %v613
        %v615 = vpop.f32.mrb[0].mxu0
        %v616 = vadd.f32 %v307, %v615
        %v617 = vpop.f32.mrb[0].mxu0
        %v618 = vadd.f32 %v311, %v617
        %619 = vmatprep.mubr.bf16.mxu0 0
        %620 = vmatmul.mubr.bf16.gmra.mrb[0].mxu0 %v417
        %v621 = vpop.f32.mrb[0].mxu0
        %v622 = vadd.f32 %v307, %v621
        %v623 = vpop.f32.mrb[0].mxu0
        %v624 = vadd.f32 %v311, %v623
        %v625 = vpop.f32.mrb[0].mxu0
        %v626 = vadd.f32 %v307, %v625
        %v627 = vpop.f32.mrb[0].mxu0
        %v628 = vadd.f32 %v311, %v627
        %629 = vmatprep.mubr.bf16.mxu0 0
        %630 = vmatmul.mubr.bf16.gmra.mrb[0].mxu0 %v420
        %v631 = vpop.f32.mrb[0].mxu0
        %v632 = vadd.f32 %v307, %v631
        %v633 = vpop.f32.mrb[0].mxu0
        %v634 = vadd.f32 %v311, %v633
        %v635 = vpop.f32.mrb[0].mxu0
        %v636 = vadd.f32 %v307, %v635
        %v637 = vpop.f32.mrb[0].mxu0
        %v638 = vadd.f32 %v311, %v637
        %639 = vmatprep.mubr.bf16.mxu0 0
        %640 = vmatmul.mubr.bf16.gmra.mrb[0].mxu0 %v423
        %v641 = vpop.f32.mrb[0].mxu0
        %v642 = vadd.f32 %v307, %v641
        %v643 = vpop.f32.mrb[0].mxu0
        %v644 = vadd.f32 %v311, %v643
        %v645 = vpop.f32.mrb[0].mxu0
        %v646 = vadd.f32 %v307, %v645
        %v647 = vpop.f32.mrb[0].mxu0
        %v648 = vadd.f32 %v311, %v647
        %649 = vmatprep.mubr.bf16.mxu0 0
        %650 = vmatmul.mubr.bf16.gmra.mrb[0].mxu0 %v426
        %v651 = vpop.f32.mrb[0].mxu0
        %v652 = vadd.f32 %v307, %v651
        %v653 = vpop.f32.mrb[0].mxu0
        %v654 = vadd.f32 %v311, %v653
        %v655 = vpop.f32.mrb[0].mxu0
        %v656 = vadd.f32 %v307, %v655
        %v657 = vpop.f32.mrb[0].mxu0
        %v658 = vadd.f32 %v311, %v657
        %659 = vmatprep.mubr.bf16.mxu0 0
        %660 = vmatmul.mubr.bf16.gmra.mrb[0].mxu0 %v429
        %v661 = vpop.f32.mrb[0].mxu0
        %v662 = vadd.f32 %v307, %v661
        %v663 = vpop.f32.mrb[0].mxu0
        %v664 = vadd.f32 %v311, %v663
        %v665 = vpop.f32.mrb[0].mxu0
        %v666 = vadd.f32 %v307, %v665
        %v667 = vpop.f32.mrb[0].mxu0
        %v668 = vadd.f32 %v311, %v667
        %669 = vdwg.mxu0
        %v670 = vmax.f32 %v479, 0.0
        %v671 = vmax.f32 %v481, 0.0
        %v672 = vmax.f32 %v592, 0.0
        %v673 = vmax.f32 %v594, 0.0
        %v674 = vmax.f32 %v483, 0.0
        %v675 = vmax.f32 %v485, 0.0
        %v676 = vmax.f32 %v596, 0.0
        %v677 = vmax.f32 %v598, 0.0
        %v678 = vmax.f32 %v489, 0.0
        %v679 = vmax.f32 %v491, 0.0
        %v680 = vmax.f32 %v602, 0.0
        %v681 = vmax.f32 %v604, 0.0
        %v682 = vmax.f32 %v493, 0.0
        %v683 = vmax.f32 %v495, 0.0
        %v684 = vmax.f32 %v606, 0.0
        %v685 = vmax.f32 %v608, 0.0
        %v686 = vmax.f32 %v499, 0.0
        %v687 = vmax.f32 %v501, 0.0
        %v688 = vmax.f32 %v612, 0.0
        %v689 = vmax.f32 %v614, 0.0
        %v690 = vmax.f32 %v503, 0.0
        %v691 = vmax.f32 %v505, 0.0
        %v692 = vmax.f32 %v616, 0.0
        %v693 = vmax.f32 %v618, 0.0
        %v694 = vmax.f32 %v509, 0.0
        %v695 = vmax.f32 %v511, 0.0
        %v696 = vmax.f32 %v622, 0.0
        %v697 = vmax.f32 %v624, 0.0
        %v698 = vmax.f32 %v513, 0.0
        %v699 = vmax.f32 %v515, 0.0
        %v700 = vmax.f32 %v626, 0.0
        %v701 = vmax.f32 %v628, 0.0
        %v702 = vmax.f32 %v519, 0.0
        %v703 = vmax.f32 %v521, 0.0
        %v704 = vmax.f32 %v632, 0.0
        %v705 = vmax.f32 %v634, 0.0
        %v706 = vmax.f32 %v523, 0.0
        %v707 = vmax.f32 %v525, 0.0
        %v708 = vmax.f32 %v636, 0.0
        %v709 = vmax.f32 %v638, 0.0
        %v710 = vmax.f32 %v529, 0.0
        %v711 = vmax.f32 %v531, 0.0
        %v712 = vmax.f32 %v642, 0.0
        %v713 = vmax.f32 %v644, 0.0
        %v714 = vmax.f32 %v533, 0.0
        %v715 = vmax.f32 %v535, 0.0
        %v716 = vmax.f32 %v646, 0.0
        %v717 = vmax.f32 %v648, 0.0
        %v718 = vmax.f32 %v539, 0.0
        %v719 = vmax.f32 %v541, 0.0
        %v720 = vmax.f32 %v652, 0.0
        %v721 = vmax.f32 %v654, 0.0
        %v722 = vmax.f32 %v543, 0.0
        %v723 = vmax.f32 %v545, 0.0
        %v724 = vmax.f32 %v656, 0.0
        %v725 = vmax.f32 %v658, 0.0
        %v726 = vmax.f32 %v549, 0.0
        %v727 = vmax.f32 %v551, 0.0
        %v728 = vmax.f32 %v662, 0.0
        %v729 = vmax.f32 %v664, 0.0
        %v730 = vmax.f32 %v553, 0.0
        %v731 = vmax.f32 %v555, 0.0
        %v732 = vmax.f32 %v666, 0.0
        %v733 = vmax.f32 %v668, 0.0
        %v734 = vpack.c.bf16 %v674, %v670
        %v735 = vpack.c.bf16 %v675, %v671
        %v736 = vpack.c.bf16 %v676, %v672
        %v737 = vpack.c.bf16 %v677, %v673
        %v738 = vpack.c.bf16 %v682, %v678
        %v739 = vpack.c.bf16 %v683, %v679
        %v740 = vpack.c.bf16 %v684, %v680
        %v741 = vpack.c.bf16 %v685, %v681
        %v742 = vpack.c.bf16 %v690, %v686
        %v743 = vpack.c.bf16 %v691, %v687
        %v744 = vpack.c.bf16 %v692, %v688
        %v745 = vpack.c.bf16 %v693, %v689
        %v746 = vpack.c.bf16 %v698, %v694
        %v747 = vpack.c.bf16 %v699, %v695
        %v748 = vpack.c.bf16 %v700, %v696
        %v749 = vpack.c.bf16 %v701, %v697
        %v750 = vpack.c.bf16 %v706, %v702
        %v751 = vpack.c.bf16 %v707, %v703
        %v752 = vpack.c.bf16 %v708, %v704
        %v753 = vpack.c.bf16 %v709, %v705
        %v754 = vpack.c.bf16 %v714, %v710
        %v755 = vpack.c.bf16 %v715, %v711
        %v756 = vpack.c.bf16 %v716, %v712
        %v757 = vpack.c.bf16 %v717, %v713
        %v758 = vpack.c.bf16 %v722, %v718
        %v759 = vpack.c.bf16 %v723, %v719
        %v760 = vpack.c.bf16 %v724, %v720
        %v761 = vpack.c.bf16 %v725, %v721
        %v762 = vpack.c.bf16 %v730, %v726
        %v763 = vpack.c.bf16 %v731, %v727
        %v764 = vpack.c.bf16 %v732, %v728
        %v765 = vpack.c.bf16 %v733, %v729
        %v766 = vld [vmem:[%s3] sm:$0xf]
        %v767 = vld [vmem:[%s3 + $0x4] sm:$0xf]
        %v768 = vld [vmem:[%s3 + $0x8] sm:$0xf]
        %v769 = vld [vmem:[%s3 + $0xc] sm:$0xf]
        %v770 = vld [vmem:[%s3 + $0x10] sm:$0xf]
        %v771 = vld [vmem:[%s3 + $0x14] sm:$0xf]
        %v772 = vld [vmem:[%s3 + $0x18] sm:$0xf]
        %v773 = vld [vmem:[%s3 + $0x1c] sm:$0xf]
        %v774 = vld [vmem:[%s3 + $0x20] sm:$0xf]
        %v775 = vld [vmem:[%s3 + $0x24] sm:$0xf]
        %v776 = vld [vmem:[%s3 + $0x28] sm:$0xf]
        %v777 = vld [vmem:[%s3 + $0x2c] sm:$0xf]
        %v778 = vld [vmem:[%s3 + $0x30] sm:$0xf]
        %v779 = vld [vmem:[%s3 + $0x34] sm:$0xf]
        %v780 = vld [vmem:[%s3 + $0x38] sm:$0xf]
        %v781 = vld [vmem:[%s3 + $0x3c] sm:$0xf]
        %v782 = vld [vmem:[%s3 + $0x40] sm:$0xf]
        %v783 = vld [vmem:[%s3 + $0x44] sm:$0xf]
        %v784 = vld [vmem:[%s3 + $0x48] sm:$0xf]
        %v785 = vld [vmem:[%s3 + $0x4c] sm:$0xf]
        %v786 = vld [vmem:[%s3 + $0x50] sm:$0xf]
        %v787 = vld [vmem:[%s3 + $0x54] sm:$0xf]
        %v788 = vld [vmem:[%s3 + $0x58] sm:$0xf]
        %v789 = vld [vmem:[%s3 + $0x5c] sm:$0xf]
        %v790 = vld [vmem:[%s3 + $0x60] sm:$0xf]
        %v791 = vld [vmem:[%s3 + $0x64] sm:$0xf]
        %v792 = vld [vmem:[%s3 + $0x68] sm:$0xf]
        %v793 = vld [vmem:[%s3 + $0x6c] sm:$0xf]
        %v794 = vld [vmem:[%s3 + $0x70] sm:$0xf]
        %v795 = vld [vmem:[%s3 + $0x74] sm:$0xf]
        %v796 = vld [vmem:[%s3 + $0x78] sm:$0xf]
        %v797 = vld [vmem:[%s3 + $0x7c] sm:$0xf]
        %v798 = vld [vmem:[%s3 + $0x80] sm:$0xf]
        %v799 = vld [vmem:[%s3 + $0x84] sm:$0xf]
        %v800 = vld [vmem:[%s3 + $0x88] sm:$0xf]
        %v801 = vld [vmem:[%s3 + $0x8c] sm:$0xf]
        %v802 = vld [vmem:[%s3 + $0x90] sm:$0xf]
        %v803 = vld [vmem:[%s3 + $0x94] sm:$0xf]
        %v804 = vld [vmem:[%s3 + $0x98] sm:$0xf]
        %v805 = vld [vmem:[%s3 + $0x9c] sm:$0xf]
        %v806 = vld [vmem:[%s3 + $0xa0] sm:$0xf]
        %v807 = vld [vmem:[%s3 + $0xa4] sm:$0xf]
        %v808 = vld [vmem:[%s3 + $0xa8] sm:$0xf]
        %v809 = vld [vmem:[%s3 + $0xac] sm:$0xf]
        %v810 = vld [vmem:[%s3 + $0xb0] sm:$0xf]
        %v811 = vld [vmem:[%s3 + $0xb4] sm:$0xf]
        %v812 = vld [vmem:[%s3 + $0xb8] sm:$0xf]
        %v813 = vld [vmem:[%s3 + $0xbc] sm:$0xf]
        %v814 = vld [vmem:[%s3 + $0xc0] sm:$0xf]
        %v815 = vld [vmem:[%s3 + $0xc4] sm:$0xf]
        %v816 = vld [vmem:[%s3 + $0xc8] sm:$0xf]
        %v817 = vld [vmem:[%s3 + $0xcc] sm:$0xf]
        %v818 = vld [vmem:[%s3 + $0xd0] sm:$0xf]
        %v819 = vld [vmem:[%s3 + $0xd4] sm:$0xf]
        %v820 = vld [vmem:[%s3 + $0xd8] sm:$0xf]
        %v821 = vld [vmem:[%s3 + $0xdc] sm:$0xf]
        %v822 = vld [vmem:[%s3 + $0xe0] sm:$0xf]
        %v823 = vld [vmem:[%s3 + $0xe4] sm:$0xf]
        %v824 = vld [vmem:[%s3 + $0xe8] sm:$0xf]
        %v825 = vld [vmem:[%s3 + $0xec] sm:$0xf]
        %v826 = vld [vmem:[%s3 + $0xf0] sm:$0xf]
        %v827 = vld [vmem:[%s3 + $0xf4] sm:$0xf]
        %v828 = vld [vmem:[%s3 + $0xf8] sm:$0xf]
        %v829 = vld [vmem:[%s3 + $0xfc] sm:$0xf]
        %v830 = vld [vmem:[%s4] sm:$0x1]
        %v832 = vlaneseq
        %v833 = vshrl.u32 %v832, 7
        %v834 = vsub.s32 0, %v833
        %v835 = vrot.slane %v830, %v834
        %v901 = vunpack.c.l.b16 %v766
        %v902 = vunpack.c.l.b16 %v767
        %v903 = vunpack.c.l.b16 %v768
        %v904 = vunpack.c.l.b16 %v769
        %v905 = vunpack.c.l.b16 %v770
        %v906 = vunpack.c.l.b16 %v771
        %v907 = vunpack.c.l.b16 %v772
        %v908 = vunpack.c.l.b16 %v773
        %v909 = vunpack.c.l.b16 %v774
        %v910 = vunpack.c.l.b16 %v775
        %v911 = vunpack.c.l.b16 %v776
        %v912 = vunpack.c.l.b16 %v777
        %v913 = vunpack.c.l.b16 %v778
        %v914 = vunpack.c.l.b16 %v779
        %v915 = vunpack.c.l.b16 %v780
        %v916 = vunpack.c.l.b16 %v781
        %v917 = vunpack.c.l.b16 %v782
        %v918 = vunpack.c.l.b16 %v783
        %v919 = vunpack.c.l.b16 %v784
        %v920 = vunpack.c.l.b16 %v785
        %v921 = vunpack.c.l.b16 %v786
        %v922 = vunpack.c.l.b16 %v787
        %v923 = vunpack.c.l.b16 %v788
        %v924 = vunpack.c.l.b16 %v789
        %v925 = vunpack.c.l.b16 %v790
        %v926 = vunpack.c.l.b16 %v791
        %v927 = vunpack.c.l.b16 %v792
        %v928 = vunpack.c.l.b16 %v793
        %v929 = vunpack.c.l.b16 %v794
        %v930 = vunpack.c.l.b16 %v795
        %v931 = vunpack.c.l.b16 %v796
        %v932 = vunpack.c.l.b16 %v797
        %v933 = vunpack.c.l.b16 %v798
        %v934 = vunpack.c.l.b16 %v799
        %v935 = vunpack.c.l.b16 %v800
        %v936 = vunpack.c.l.b16 %v801
        %v937 = vunpack.c.l.b16 %v802
        %v938 = vunpack.c.l.b16 %v803
        %v939 = vunpack.c.l.b16 %v804
        %v940 = vunpack.c.l.b16 %v805
        %v941 = vunpack.c.l.b16 %v806
        %v942 = vunpack.c.l.b16 %v807
        %v943 = vunpack.c.l.b16 %v808
        %v944 = vunpack.c.l.b16 %v809
        %v945 = vunpack.c.l.b16 %v810
        %v946 = vunpack.c.l.b16 %v811
        %v947 = vunpack.c.l.b16 %v812
        %v948 = vunpack.c.l.b16 %v813
        %v949 = vunpack.c.l.b16 %v814
        %v950 = vunpack.c.l.b16 %v815
        %v951 = vunpack.c.l.b16 %v816
        %v952 = vunpack.c.l.b16 %v817
        %v953 = vunpack.c.l.b16 %v818
        %v954 = vunpack.c.l.b16 %v819
        %v955 = vunpack.c.l.b16 %v820
        %v956 = vunpack.c.l.b16 %v821
        %v957 = vunpack.c.l.b16 %v822
        %v958 = vunpack.c.l.b16 %v823
        %v959 = vunpack.c.l.b16 %v824
        %v960 = vunpack.c.l.b16 %v825
        %v961 = vunpack.c.l.b16 %v826
        %v962 = vunpack.c.l.b16 %v827
        %v963 = vunpack.c.l.b16 %v828
        %v964 = vunpack.c.l.b16 %v829
        %v965 = vpack.c.b16 %v902, %v901
        %v966 = vpack.c.b16 %v904, %v903
        %v967 = vpack.c.b16 %v906, %v905
        %v968 = vpack.c.b16 %v908, %v907
        %v969 = vpack.c.b16 %v910, %v909
        %v970 = vpack.c.b16 %v912, %v911
        %v971 = vpack.c.b16 %v914, %v913
        %v972 = vpack.c.b16 %v916, %v915
        %v973 = vpack.c.b16 %v918, %v917
        %v974 = vpack.c.b16 %v920, %v919
        %v975 = vpack.c.b16 %v922, %v921
        %v976 = vpack.c.b16 %v924, %v923
        %v977 = vpack.c.b16 %v926, %v925
        %v978 = vpack.c.b16 %v928, %v927
        %v979 = vpack.c.b16 %v930, %v929
        %v980 = vpack.c.b16 %v932, %v931
        %v981 = vpack.c.b16 %v934, %v933
        %v982 = vpack.c.b16 %v936, %v935
        %v983 = vpack.c.b16 %v938, %v937
        %v984 = vpack.c.b16 %v940, %v939
        %v985 = vpack.c.b16 %v942, %v941
        %v986 = vpack.c.b16 %v944, %v943
        %v987 = vpack.c.b16 %v946, %v945
        %v988 = vpack.c.b16 %v948, %v947
        %v989 = vpack.c.b16 %v950, %v949
        %v990 = vpack.c.b16 %v952, %v951
        %v991 = vpack.c.b16 %v954, %v953
        %v992 = vpack.c.b16 %v956, %v955
        %v993 = vpack.c.b16 %v958, %v957
        %v994 = vpack.c.b16 %v960, %v959
        %v995 = vpack.c.b16 %v962, %v961
        %v996 = vpack.c.b16 %v964, %v963
        %1029 = vmatprep.subr.bf16.mxu0 0
        %1030 = vmatpush1.bf16.msra.mxu0 %v965
        %1031 = vmatprep.subr.bf16.mxu0 0
        %1032 = vmatpush1.bf16.msra.mxu0 %v966
        %1033 = vmatprep.subr.bf16.mxu0 0
        %1034 = vmatpush1.bf16.msra.mxu0 %v967
        %1035 = vmatprep.subr.bf16.mxu0 0
        %1036 = vmatpush1.bf16.msra.mxu0 %v968
        %1037 = vmatprep.subr.bf16.mxu0 0
        %1038 = vmatpush1.bf16.msra.mxu0 %v969
        %1039 = vmatprep.subr.bf16.mxu0 0
        %1040 = vmatpush1.bf16.msra.mxu0 %v970
        %1041 = vmatprep.subr.bf16.mxu0 0
        %1042 = vmatpush1.bf16.msra.mxu0 %v971
        %1043 = vmatprep.subr.bf16.mxu0 0
        %1044 = vmatpush1.bf16.msra.mxu0 %v972
        %1045 = vmatprep.subr.bf16.mxu0 0
        %1046 = vmatpush1.bf16.msra.mxu0 %v973
        %1047 = vmatprep.subr.bf16.mxu0 0
        %1048 = vmatpush1.bf16.msra.mxu0 %v974
        %1049 = vmatprep.subr.bf16.mxu0 0
        %1050 = vmatpush1.bf16.msra.mxu0 %v975
        %1051 = vmatprep.subr.bf16.mxu0 0
        %1052 = vmatpush1.bf16.msra.mxu0 %v976
        %1053 = vmatprep.subr.bf16.mxu0 0
        %1054 = vmatpush1.bf16.msra.mxu0 %v977
        %1055 = vmatprep.subr.bf16.mxu0 0
        %1056 = vmatpush1.bf16.msra.mxu0 %v978
        %1057 = vmatprep.subr.bf16.mxu0 0
        %1058 = vmatpush1.bf16.msra.mxu0 %v979
        %1059 = vmatprep.subr.bf16.mxu0 0
        %1060 = vmatpush1.bf16.msra.mxu0 %v980
        %1061 = vmatprep.mubr.bf16.mxu0 %v735
        %1062 = vmatmul.mubr.bf16.gmra.mrb[0].mxu0 %v734
        %v1063 = vpop.f32.mrb[0].mxu0
        %v1064 = vadd.f32 %v835, %v1063
        %v1065 = vpop.f32.mrb[0].mxu0
        %v1066 = vpop.f32.mrb[0].mxu0
        %v1067 = vadd.f32 %v835, %v1066
        %v1068 = vpop.f32.mrb[0].mxu0
        %1069 = vmatprep.mubr.bf16.mxu0 %v739
        %1070 = vmatmul.mubr.bf16.gmra.mrb[0].mxu0 %v738
        %v1071 = vpop.f32.mrb[0].mxu0
        %v1072 = vadd.f32 %v835, %v1071
        %v1073 = vpop.f32.mrb[0].mxu0
        %v1074 = vpop.f32.mrb[0].mxu0
        %v1075 = vadd.f32 %v835, %v1074
        %v1076 = vpop.f32.mrb[0].mxu0
        %1077 = vmatprep.mubr.bf16.mxu0 %v743
        %1078 = vmatmul.mubr.bf16.gmra.mrb[0].mxu0 %v742
        %v1079 = vpop.f32.mrb[0].mxu0
        %v1080 = vadd.f32 %v835, %v1079
        %v1081 = vpop.f32.mrb[0].mxu0
        %v1082 = vpop.f32.mrb[0].mxu0
        %v1083 = vadd.f32 %v835, %v1082
        %v1084 = vpop.f32.mrb[0].mxu0
        %1085 = vmatprep.mubr.bf16.mxu0 %v747
        %1086 = vmatmul.mubr.bf16.gmra.mrb[0].mxu0 %v746
        %v1087 = vpop.f32.mrb[0].mxu0
        %v1088 = vadd.f32 %v835, %v1087
        %v1089 = vpop.f32.mrb[0].mxu0
        %v1090 = vpop.f32.mrb[0].mxu0
        %v1091 = vadd.f32 %v835, %v1090
        %v1092 = vpop.f32.mrb[0].mxu0
        %1093 = vmatprep.mubr.bf16.mxu0 %v751
        %1094 = vmatmul.mubr.bf16.gmra.mrb[0].mxu0 %v750
        %v1095 = vpop.f32.mrb[0].mxu0
        %v1096 = vadd.f32 %v835, %v1095
        %v1097 = vpop.f32.mrb[0].mxu0
        %v1098 = vpop.f32.mrb[0].mxu0
        %v1099 = vadd.f32 %v835, %v1098
        %v1100 = vpop.f32.mrb[0].mxu0
        %1101 = vmatprep.mubr.bf16.mxu0 %v755
        %1102 = vmatmul.mubr.bf16.gmra.mrb[0].mxu0 %v754
        %v1103 = vpop.f32.mrb[0].mxu0
        %v1104 = vadd.f32 %v835, %v1103
        %v1105 = vpop.f32.mrb[0].mxu0
        %v1106 = vpop.f32.mrb[0].mxu0
        %v1107 = vadd.f32 %v835, %v1106
        %v1108 = vpop.f32.mrb[0].mxu0
        %1109 = vmatprep.mubr.bf16.mxu0 %v759
        %1110 = vmatmul.mubr.bf16.gmra.mrb[0].mxu0 %v758
        %v1111 = vpop.f32.mrb[0].mxu0
        %v1112 = vadd.f32 %v835, %v1111
        %v1113 = vpop.f32.mrb[0].mxu0
        %v1114 = vpop.f32.mrb[0].mxu0
        %v1115 = vadd.f32 %v835, %v1114
        %v1116 = vpop.f32.mrb[0].mxu0
        %1117 = vmatprep.mubr.bf16.mxu0 %v763
        %1118 = vmatmul.mubr.bf16.gmra.mrb[0].mxu0 %v762
        %v1119 = vpop.f32.mrb[0].mxu0
        %v1120 = vadd.f32 %v835, %v1119
        %v1121 = vpop.f32.mrb[0].mxu0
        %v1122 = vpop.f32.mrb[0].mxu0
        %v1123 = vadd.f32 %v835, %v1122
        %v1124 = vpop.f32.mrb[0].mxu0
        %1125 = vdwg.mxu0
        %1126 = vmatprep.subr.bf16.mxu0 0
        %1127 = vmatpush1.bf16.msra.mxu0 %v981
        %1128 = vmatprep.subr.bf16.mxu0 0
        %1129 = vmatpush1.bf16.msra.mxu0 %v982
        %1130 = vmatprep.subr.bf16.mxu0 0
        %1131 = vmatpush1.bf16.msra.mxu0 %v983
        %1132 = vmatprep.subr.bf16.mxu0 0
        %1133 = vmatpush1.bf16.msra.mxu0 %v984
        %1134 = vmatprep.subr.bf16.mxu0 0
        %1135 = vmatpush1.bf16.msra.mxu0 %v985
        %1136 = vmatprep.subr.bf16.mxu0 0
        %1137 = vmatpush1.bf16.msra.mxu0 %v986
        %1138 = vmatprep.subr.bf16.mxu0 0
        %1139 = vmatpush1.bf16.msra.mxu0 %v987
        %1140 = vmatprep.subr.bf16.mxu0 0
        %1141 = vmatpush1.bf16.msra.mxu0 %v988
        %1142 = vmatprep.subr.bf16.mxu0 0
        %1143 = vmatpush1.bf16.msra.mxu0 %v989
        %1144 = vmatprep.subr.bf16.mxu0 0
        %1145 = vmatpush1.bf16.msra.mxu0 %v990
        %1146 = vmatprep.subr.bf16.mxu0 0
        %1147 = vmatpush1.bf16.msra.mxu0 %v991
        %1148 = vmatprep.subr.bf16.mxu0 0
        %1149 = vmatpush1.bf16.msra.mxu0 %v992
        %1150 = vmatprep.subr.bf16.mxu0 0
        %1151 = vmatpush1.bf16.msra.mxu0 %v993
        %1152 = vmatprep.subr.bf16.mxu0 0
        %1153 = vmatpush1.bf16.msra.mxu0 %v994
        %1154 = vmatprep.subr.bf16.mxu0 0
        %1155 = vmatpush1.bf16.msra.mxu0 %v995
        %1156 = vmatprep.subr.bf16.mxu0 0
        %1157 = vmatpush1.bf16.msra.mxu0 %v996
        %1158 = vmatprep.mubr.bf16.mxu0 %v737
        %1159 = vmatmul.mubr.bf16.gmra.mrb[0].mxu0 %v736
        %v1160 = vpop.f32.mrb[0].mxu0
        %v1161 = vadd.f32 %v1064, %v1160
        %v1162 = vpop.f32.mrb[0].mxu0
        %v1163 = vpop.f32.mrb[0].mxu0
        %v1164 = vadd.f32 %v1067, %v1163
        %v1165 = vpop.f32.mrb[0].mxu0
        %1166 = vmatprep.mubr.bf16.mxu0 %v741
        %1167 = vmatmul.mubr.bf16.gmra.mrb[0].mxu0 %v740
        %v1168 = vpop.f32.mrb[0].mxu0
        %v1169 = vadd.f32 %v1072, %v1168
        %v1170 = vpop.f32.mrb[0].mxu0
        %v1171 = vpop.f32.mrb[0].mxu0
        %v1172 = vadd.f32 %v1075, %v1171
        %v1173 = vpop.f32.mrb[0].mxu0
        %1174 = vmatprep.mubr.bf16.mxu0 %v745
        %1175 = vmatmul.mubr.bf16.gmra.mrb[0].mxu0 %v744
        %v1176 = vpop.f32.mrb[0].mxu0
        %v1177 = vadd.f32 %v1080, %v1176
        %v1178 = vpop.f32.mrb[0].mxu0
        %v1179 = vpop.f32.mrb[0].mxu0
        %v1180 = vadd.f32 %v1083, %v1179
        %v1181 = vpop.f32.mrb[0].mxu0
        %1182 = vmatprep.mubr.bf16.mxu0 %v749
        %1183 = vmatmul.mubr.bf16.gmra.mrb[0].mxu0 %v748
        %v1184 = vpop.f32.mrb[0].mxu0
        %v1185 = vadd.f32 %v1088, %v1184
        %v1186 = vpop.f32.mrb[0].mxu0
        %v1187 = vpop.f32.mrb[0].mxu0
        %v1188 = vadd.f32 %v1091, %v1187
        %v1189 = vpop.f32.mrb[0].mxu0
        %1190 = vmatprep.mubr.bf16.mxu0 %v753
        %1191 = vmatmul.mubr.bf16.gmra.mrb[0].mxu0 %v752
        %v1192 = vpop.f32.mrb[0].mxu0
        %v1193 = vadd.f32 %v1096, %v1192
        %v1194 = vpop.f32.mrb[0].mxu0
        %v1195 = vpop.f32.mrb[0].mxu0
        %v1196 = vadd.f32 %v1099, %v1195
        %v1197 = vpop.f32.mrb[0].mxu0
        %1198 = vmatprep.mubr.bf16.mxu0 %v757
        %1199 = vmatmul.mubr.bf16.gmra.mrb[0].mxu0 %v756
        %v1200 = vpop.f32.mrb[0].mxu0
        %v1201 = vadd.f32 %v1104, %v1200
        %v1202 = vpop.f32.mrb[0].mxu0
        %v1203 = vpop.f32.mrb[0].mxu0
        %v1204 = vadd.f32 %v1107, %v1203
        %v1205 = vpop.f32.mrb[0].mxu0
        %1206 = vmatprep.mubr.bf16.mxu0 %v761
        %1207 = vmatmul.mubr.bf16.gmra.mrb[0].mxu0 %v760
        %v1208 = vpop.f32.mrb[0].mxu0
        %v1209 = vadd.f32 %v1112, %v1208
        %v1210 = vpop.f32.mrb[0].mxu0
        %v1211 = vpop.f32.mrb[0].mxu0
        %v1212 = vadd.f32 %v1115, %v1211
        %v1213 = vpop.f32.mrb[0].mxu0
        %1214 = vmatprep.mubr.bf16.mxu0 %v765
        %1215 = vmatmul.mubr.bf16.gmra.mrb[0].mxu0 %v764
        %v1216 = vpop.f32.mrb[0].mxu0
        %v1217 = vadd.f32 %v1120, %v1216
        %v1218 = vpop.f32.mrb[0].mxu0
        %v1219 = vpop.f32.mrb[0].mxu0
        %v1220 = vadd.f32 %v1123, %v1219
        %v1221 = vpop.f32.mrb[0].mxu0
        %1222 = vdwg.mxu0
        %1223 = vst [vmem:[%s255] sm:$0xff] %v1161
        %1224 = vst [vmem:[%s255 + $0x8] sm:$0xff] %v1164
        %1225 = vst [vmem:[%s255 + $0x10] sm:$0xff] %v1169
        %1226 = vst [vmem:[%s255 + $0x18] sm:$0xff] %v1172
        %1227 = vst [vmem:[%s255 + $0x20] sm:$0xff] %v1177
        %1228 = vst [vmem:[%s255 + $0x28] sm:$0xff] %v1180
        %1229 = vst [vmem:[%s255 + $0x30] sm:$0xff] %v1185
        %1230 = vst [vmem:[%s255 + $0x38] sm:$0xff] %v1188
        %1231 = vst [vmem:[%s255 + $0x40] sm:$0xff] %v1193
        %1232 = vst [vmem:[%s255 + $0x48] sm:$0xff] %v1196
        %1233 = vst [vmem:[%s255 + $0x50] sm:$0xff] %v1201
        %1234 = vst [vmem:[%s255 + $0x58] sm:$0xff] %v1204
        %1235 = vst [vmem:[%s255 + $0x60] sm:$0xff] %v1209
        %1236 = vst [vmem:[%s255 + $0x68] sm:$0xff] %v1212
        %1237 = vst [vmem:[%s255 + $0x70] sm:$0xff] %v1217
        %1238 = vst [vmem:[%s255 + $0x78] sm:$0xff] %v1220
        %1255 = vrot.lane.b32.xlu0 %v1161, 119
        %v1256 = vpop.permute.xlu0 %1255
        %1257 = vrot.lane.b32.xlu0 %v1164, 119
        %v1258 = vpop.permute.xlu0 %1257
        %1259 = vrot.lane.b32.xlu0 %v1169, 119
        %v1260 = vpop.permute.xlu0 %1259
        %1261 = vrot.lane.b32.xlu0 %v1172, 119
        %v1262 = vpop.permute.xlu0 %1261
        %1263 = vrot.lane.b32.xlu0 %v1177, 119
        %v1264 = vpop.permute.xlu0 %1263
        %1265 = vrot.lane.b32.xlu0 %v1180, 119
        %v1266 = vpop.permute.xlu0 %1265
        %1267 = vrot.lane.b32.xlu0 %v1185, 119
        %v1268 = vpop.permute.xlu0 %1267
        %1269 = vrot.lane.b32.xlu0 %v1188, 119
        %v1270 = vpop.permute.xlu0 %1269
        %1271 = vrot.lane.b32.xlu0 %v1193, 119
        %v1272 = vpop.permute.xlu0 %1271
        %1273 = vrot.lane.b32.xlu0 %v1196, 119
        %v1274 = vpop.permute.xlu0 %1273
        %1275 = vrot.lane.b32.xlu0 %v1201, 119
        %v1276 = vpop.permute.xlu0 %1275
        %1277 = vrot.lane.b32.xlu0 %v1204, 119
        %v1278 = vpop.permute.xlu0 %1277
        %1279 = vrot.lane.b32.xlu0 %v1209, 119
        %v1280 = vpop.permute.xlu0 %1279
        %1281 = vrot.lane.b32.xlu0 %v1212, 119
        %v1282 = vpop.permute.xlu0 %1281
        %1283 = vrot.lane.b32.xlu0 %v1217, 119
        %v1284 = vpop.permute.xlu0 %1283
        %1285 = vrot.lane.b32.xlu0 %v1220, 119
        %v1286 = vpop.permute.xlu0 %1285
        %v1303 = vmax.f32 %v1161, %v1256
        %v1304 = vmax.f32 %v1164, %v1258
        %v1305 = vmax.f32 %v1169, %v1260
        %v1306 = vmax.f32 %v1172, %v1262
        %v1307 = vmax.f32 %v1177, %v1264
        %v1308 = vmax.f32 %v1180, %v1266
        %v1309 = vmax.f32 %v1185, %v1268
        %v1310 = vmax.f32 %v1188, %v1270
        %v1311 = vmax.f32 %v1193, %v1272
        %v1312 = vmax.f32 %v1196, %v1274
        %v1313 = vmax.f32 %v1201, %v1276
        %v1314 = vmax.f32 %v1204, %v1278
        %v1315 = vmax.f32 %v1209, %v1280
        %v1316 = vmax.f32 %v1212, %v1282
        %v1317 = vmax.f32 %v1217, %v1284
        %v1318 = vmax.f32 %v1220, %v1286
        %v1319 = vsub.f32 %v1161, %v1303
        %v1320 = vsub.f32 %v1164, %v1304
        %v1321 = vsub.f32 %v1169, %v1305
        %v1322 = vsub.f32 %v1172, %v1306
        %v1323 = vsub.f32 %v1177, %v1307
        %v1324 = vsub.f32 %v1180, %v1308
        %v1325 = vsub.f32 %v1185, %v1309
        %v1326 = vsub.f32 %v1188, %v1310
        %v1327 = vsub.f32 %v1193, %v1311
        %v1328 = vsub.f32 %v1196, %v1312
        %v1329 = vsub.f32 %v1201, %v1313
        %v1330 = vsub.f32 %v1204, %v1314
        %v1331 = vsub.f32 %v1209, %v1315
        %v1332 = vsub.f32 %v1212, %v1316
        %v1333 = vsub.f32 %v1217, %v1317
        %v1334 = vsub.f32 %v1220, %v1318
        %v1335 = vmul.f32 %v1319, 1.442695
        %v1336 = vpow.pop %v1335
        %v1337 = vmul.f32 %v1320, 1.442695
        %v1338 = vpow.pop %v1337
        %v1339 = vmul.f32 %v1321, 1.442695
        %v1340 = vpow.pop %v1339
        %v1341 = vmul.f32 %v1322, 1.442695
        %v1342 = vpow.pop %v1341
        %v1343 = vmul.f32 %v1323, 1.442695
        %v1344 = vpow.pop %v1343
        %v1345 = vmul.f32 %v1324, 1.442695
        %v1346 = vpow.pop %v1345
        %v1347 = vmul.f32 %v1325, 1.442695
        %v1348 = vpow.pop %v1347
        %v1349 = vmul.f32 %v1326, 1.442695
        %v1350 = vpow.pop %v1349
        %v1351 = vmul.f32 %v1327, 1.442695
        %v1352 = vpow.pop %v1351
        %v1353 = vmul.f32 %v1328, 1.442695
        %v1354 = vpow.pop %v1353
        %v1355 = vmul.f32 %v1329, 1.442695
        %v1356 = vpow.pop %v1355
        %v1357 = vmul.f32 %v1330, 1.442695
        %v1358 = vpow.pop %v1357
        %v1359 = vmul.f32 %v1331, 1.442695
        %v1360 = vpow.pop %v1359
        %v1361 = vmul.f32 %v1332, 1.442695
        %v1362 = vpow.pop %v1361
        %v1363 = vmul.f32 %v1333, 1.442695
        %v1364 = vpow.pop %v1363
        %v1365 = vmul.f32 %v1334, 1.442695
        %v1366 = vpow.pop %v1365
        %1383 = vrot.lane.b32.xlu0 %v1303, 9
        %v1384 = vpop.permute.xlu0 %1383
        %1385 = vrot.lane.b32.xlu0 %v1304, 9
        %v1386 = vpop.permute.xlu0 %1385
        %1387 = vrot.lane.b32.xlu0 %v1305, 9
        %v1388 = vpop.permute.xlu0 %1387
        %1389 = vrot.lane.b32.xlu0 %v1306, 9
        %v1390 = vpop.permute.xlu0 %1389
        %1391 = vrot.lane.b32.xlu0 %v1307, 9
        %v1392 = vpop.permute.xlu0 %1391
        %1393 = vrot.lane.b32.xlu0 %v1308, 9
        %v1394 = vpop.permute.xlu0 %1393
        %1395 = vrot.lane.b32.xlu0 %v1309, 9
        %v1396 = vpop.permute.xlu0 %1395
        %1397 = vrot.lane.b32.xlu0 %v1310, 9
        %v1398 = vpop.permute.xlu0 %1397
        %1399 = vrot.lane.b32.xlu0 %v1311, 9
        %v1400 = vpop.permute.xlu0 %1399
        %1401 = vrot.lane.b32.xlu0 %v1312, 9
        %v1402 = vpop.permute.xlu0 %1401
        %1403 = vrot.lane.b32.xlu0 %v1313, 9
        %v1404 = vpop.permute.xlu0 %1403
        %1405 = vrot.lane.b32.xlu0 %v1314, 9
        %v1406 = vpop.permute.xlu0 %1405
        %1407 = vrot.lane.b32.xlu0 %v1315, 9
        %v1408 = vpop.permute.xlu0 %1407
        %1409 = vrot.lane.b32.xlu0 %v1316, 9
        %v1410 = vpop.permute.xlu0 %1409
        %1411 = vrot.lane.b32.xlu0 %v1317, 9
        %v1412 = vpop.permute.xlu0 %1411
        %1413 = vrot.lane.b32.xlu0 %v1318, 9
        %v1414 = vpop.permute.xlu0 %1413
        %v1431 = vsub.f32 %v1161, %v1384
        %v1432 = vsub.f32 %v1164, %v1386
        %v1433 = vsub.f32 %v1169, %v1388
        %v1434 = vsub.f32 %v1172, %v1390
        %v1435 = vsub.f32 %v1177, %v1392
        %v1436 = vsub.f32 %v1180, %v1394
        %v1437 = vsub.f32 %v1185, %v1396
        %v1438 = vsub.f32 %v1188, %v1398
        %v1439 = vsub.f32 %v1193, %v1400
        %v1440 = vsub.f32 %v1196, %v1402
        %v1441 = vsub.f32 %v1201, %v1404
        %v1442 = vsub.f32 %v1204, %v1406
        %v1443 = vsub.f32 %v1209, %v1408
        %v1444 = vsub.f32 %v1212, %v1410
        %v1445 = vsub.f32 %v1217, %v1412
        %v1446 = vsub.f32 %v1220, %v1414
        %v1447 = vmul.f32 %v1431, 1.442695
        %v1448 = vpow.pop %v1447
        %v1449 = vmul.f32 %v1432, 1.442695
        %v1450 = vpow.pop %v1449
        %v1451 = vmul.f32 %v1433, 1.442695
        %v1452 = vpow.pop %v1451
        %v1453 = vmul.f32 %v1434, 1.442695
        %v1454 = vpow.pop %v1453
        %v1455 = vmul.f32 %v1435, 1.442695
        %v1456 = vpow.pop %v1455
        %v1457 = vmul.f32 %v1436, 1.442695
        %v1458 = vpow.pop %v1457
        %v1459 = vmul.f32 %v1437, 1.442695
        %v1460 = vpow.pop %v1459
        %v1461 = vmul.f32 %v1438, 1.442695
        %v1462 = vpow.pop %v1461
        %v1463 = vmul.f32 %v1439, 1.442695
        %v1464 = vpow.pop %v1463
        %v1465 = vmul.f32 %v1440, 1.442695
        %v1466 = vpow.pop %v1465
        %v1467 = vmul.f32 %v1441, 1.442695
        %v1468 = vpow.pop %v1467
        %v1469 = vmul.f32 %v1442, 1.442695
        %v1470 = vpow.pop %v1469
        %v1471 = vmul.f32 %v1443, 1.442695
        %v1472 = vpow.pop %v1471
        %v1473 = vmul.f32 %v1444, 1.442695
        %v1474 = vpow.pop %v1473
        %v1475 = vmul.f32 %v1445, 1.442695
        %v1476 = vpow.pop %v1475
        %v1477 = vmul.f32 %v1446, 1.442695
        %v1478 = vpow.pop %v1477
        %1495 = vrot.lane.b32.xlu0 %v1448, 119
        %v1496 = vpop.permute.xlu0 %1495
        %1497 = vrot.lane.b32.xlu0 %v1450, 119
        %v1498 = vpop.permute.xlu0 %1497
        %1499 = vrot.lane.b32.xlu0 %v1452, 119
        %v1500 = vpop.permute.xlu0 %1499
        %1501 = vrot.lane.b32.xlu0 %v1454, 119
        %v1502 = vpop.permute.xlu0 %1501
        %1503 = vrot.lane.b32.xlu0 %v1456, 119
        %v1504 = vpop.permute.xlu0 %1503
        %1505 = vrot.lane.b32.xlu0 %v1458, 119
        %v1506 = vpop.permute.xlu0 %1505
        %1507 = vrot.lane.b32.xlu0 %v1460, 119
        %v1508 = vpop.permute.xlu0 %1507
        %1509 = vrot.lane.b32.xlu0 %v1462, 119
        %v1510 = vpop.permute.xlu0 %1509
        %1511 = vrot.lane.b32.xlu0 %v1464, 119
        %v1512 = vpop.permute.xlu0 %1511
        %1513 = vrot.lane.b32.xlu0 %v1466, 119
        %v1514 = vpop.permute.xlu0 %1513
        %1515 = vrot.lane.b32.xlu0 %v1468, 119
        %v1516 = vpop.permute.xlu0 %1515
        %1517 = vrot.lane.b32.xlu0 %v1470, 119
        %v1518 = vpop.permute.xlu0 %1517
        %1519 = vrot.lane.b32.xlu0 %v1472, 119
        %v1520 = vpop.permute.xlu0 %1519
        %1521 = vrot.lane.b32.xlu0 %v1474, 119
        %v1522 = vpop.permute.xlu0 %1521
        %1523 = vrot.lane.b32.xlu0 %v1476, 119
        %v1524 = vpop.permute.xlu0 %1523
        %1525 = vrot.lane.b32.xlu0 %v1478, 119
        %v1526 = vpop.permute.xlu0 %1525
        %v1543 = vadd.f32 %v1336, %v1496
        %v1544 = vadd.f32 %v1338, %v1498
        %v1545 = vadd.f32 %v1340, %v1500
        %v1546 = vadd.f32 %v1342, %v1502
        %v1547 = vadd.f32 %v1344, %v1504
        %v1548 = vadd.f32 %v1346, %v1506
        %v1549 = vadd.f32 %v1348, %v1508
        %v1550 = vadd.f32 %v1350, %v1510
        %v1551 = vadd.f32 %v1352, %v1512
        %v1552 = vadd.f32 %v1354, %v1514
        %v1553 = vadd.f32 %v1356, %v1516
        %v1554 = vadd.f32 %v1358, %v1518
        %v1555 = vadd.f32 %v1360, %v1520
        %v1556 = vadd.f32 %v1362, %v1522
        %v1557 = vadd.f32 %v1364, %v1524
        %v1558 = vadd.f32 %v1366, %v1526
        %v1559 = vrcp.pop %v1543
        %v1560 = vrcp.pop %v1544
        %v1561 = vrcp.pop %v1545
        %v1562 = vrcp.pop %v1546
        %v1563 = vrcp.pop %v1547
        %v1564 = vrcp.pop %v1548
        %v1565 = vrcp.pop %v1549
        %v1566 = vrcp.pop %v1550
        %v1567 = vrcp.pop %v1551
        %v1568 = vrcp.pop %v1552
        %v1569 = vrcp.pop %v1553
        %v1570 = vrcp.pop %v1554
        %v1571 = vrcp.pop %v1555
        %v1572 = vrcp.pop %v1556
        %v1573 = vrcp.pop %v1557
        %v1574 = vrcp.pop %v1558
        %v1575 = vmul.f32 %v1336, %v1559
        %v1576 = vmul.f32 %v1338, %v1560
        %v1577 = vmul.f32 %v1340, %v1561
        %v1578 = vmul.f32 %v1342, %v1562
        %v1579 = vmul.f32 %v1344, %v1563
        %v1580 = vmul.f32 %v1346, %v1564
        %v1581 = vmul.f32 %v1348, %v1565
        %v1582 = vmul.f32 %v1350, %v1566
        %v1583 = vmul.f32 %v1352, %v1567
        %v1584 = vmul.f32 %v1354, %v1568
        %v1585 = vmul.f32 %v1356, %v1569
        %v1586 = vmul.f32 %v1358, %v1570
        %v1587 = vmul.f32 %v1360, %v1571
        %v1588 = vmul.f32 %v1362, %v1572
        %v1589 = vmul.f32 %v1364, %v1573
        %v1590 = vmul.f32 %v1366, %v1574
        %vm1591 = vcmask 72704
        %1592 = vst.msk [vmem:[%s255] sm:$0xff] %vm1591, %v1575
        %1593 = vst.msk [vmem:[%s255 + $0x8] sm:$0xff] %vm1591, %v1576
        %1594 = vst.msk [vmem:[%s255 + $0x10] sm:$0xff] %vm1591, %v1577
        %1595 = vst.msk [vmem:[%s255 + $0x18] sm:$0xff] %vm1591, %v1578
        %1596 = vst.msk [vmem:[%s255 + $0x20] sm:$0xff] %vm1591, %v1579
        %1597 = vst.msk [vmem:[%s255 + $0x28] sm:$0xff] %vm1591, %v1580
        %1598 = vst.msk [vmem:[%s255 + $0x30] sm:$0xff] %vm1591, %v1581
        %1599 = vst.msk [vmem:[%s255 + $0x38] sm:$0xff] %vm1591, %v1582
        %1600 = vst.msk [vmem:[%s255 + $0x40] sm:$0xff] %vm1591, %v1583
        %1601 = vst.msk [vmem:[%s255 + $0x48] sm:$0xff] %vm1591, %v1584
        %1602 = vst.msk [vmem:[%s255 + $0x50] sm:$0xff] %vm1591, %v1585
        %1603 = vst.msk [vmem:[%s255 + $0x58] sm:$0xff] %vm1591, %v1586
        %1604 = vst.msk [vmem:[%s255 + $0x60] sm:$0xff] %vm1591, %v1587
        %1605 = vst.msk [vmem:[%s255 + $0x68] sm:$0xff] %vm1591, %v1588
        %1606 = vst.msk [vmem:[%s255 + $0x70] sm:$0xff] %vm1591, %v1589
        %1607 = vst.msk [vmem:[%s255 + $0x78] sm:$0xff] %vm1591, %v1590
        %1624 = vrot.lane.b32.xlu0 %v1559, 9
        %v1625 = vpop.permute.xlu0 %1624
        %1626 = vrot.lane.b32.xlu0 %v1560, 9
        %v1627 = vpop.permute.xlu0 %1626
        %1628 = vrot.lane.b32.xlu0 %v1561, 9
        %v1629 = vpop.permute.xlu0 %1628
        %1630 = vrot.lane.b32.xlu0 %v1562, 9
        %v1631 = vpop.permute.xlu0 %1630
        %1632 = vrot.lane.b32.xlu0 %v1563, 9
        %v1633 = vpop.permute.xlu0 %1632
        %1634 = vrot.lane.b32.xlu0 %v1564, 9
        %v1635 = vpop.permute.xlu0 %1634
        %1636 = vrot.lane.b32.xlu0 %v1565, 9
        %v1637 = vpop.permute.xlu0 %1636
        %1638 = vrot.lane.b32.xlu0 %v1566, 9
        %v1639 = vpop.permute.xlu0 %1638
        %1640 = vrot.lane.b32.xlu0 %v1567, 9
        %v1641 = vpop.permute.xlu0 %1640
        %1642 = vrot.lane.b32.xlu0 %v1568, 9
        %v1643 = vpop.permute.xlu0 %1642
        %1644 = vrot.lane.b32.xlu0 %v1569, 9
        %v1645 = vpop.permute.xlu0 %1644
        %1646 = vrot.lane.b32.xlu0 %v1570, 9
        %v1647 = vpop.permute.xlu0 %1646
        %1648 = vrot.lane.b32.xlu0 %v1571, 9
        %v1649 = vpop.permute.xlu0 %1648
        %1650 = vrot.lane.b32.xlu0 %v1572, 9
        %v1651 = vpop.permute.xlu0 %1650
        %1652 = vrot.lane.b32.xlu0 %v1573, 9
        %v1653 = vpop.permute.xlu0 %1652
        %1654 = vrot.lane.b32.xlu0 %v1574, 9
        %v1655 = vpop.permute.xlu0 %1654
        %v1672 = vmul.f32 %v1448, %v1625
        %v1673 = vmul.f32 %v1450, %v1627
        %v1674 = vmul.f32 %v1452, %v1629
        %v1675 = vmul.f32 %v1454, %v1631
        %v1676 = vmul.f32 %v1456, %v1633
        %v1677 = vmul.f32 %v1458, %v1635
        %v1678 = vmul.f32 %v1460, %v1637
        %v1679 = vmul.f32 %v1462, %v1639
        %v1680 = vmul.f32 %v1464, %v1641
        %v1681 = vmul.f32 %v1466, %v1643
        %v1682 = vmul.f32 %v1468, %v1645
        %v1683 = vmul.f32 %v1470, %v1647
        %v1684 = vmul.f32 %v1472, %v1649
        %v1685 = vmul.f32 %v1474, %v1651
        %v1686 = vmul.f32 %v1476, %v1653
        %v1687 = vmul.f32 %v1478, %v1655
        %vm1688 = vcmask 146504
        %1689 = vst.msk [vmem:[%s255] sm:$0xff] %vm1688, %v1672
        %1690 = vst.msk [vmem:[%s255 + $0x8] sm:$0xff] %vm1688, %v1673
        %1691 = vst.msk [vmem:[%s255 + $0x10] sm:$0xff] %vm1688, %v1674
        %1692 = vst.msk [vmem:[%s255 + $0x18] sm:$0xff] %vm1688, %v1675
        %1693 = vst.msk [vmem:[%s255 + $0x20] sm:$0xff] %vm1688, %v1676
        %1694 = vst.msk [vmem:[%s255 + $0x28] sm:$0xff] %vm1688, %v1677
        %1695 = vst.msk [vmem:[%s255 + $0x30] sm:$0xff] %vm1688, %v1678
        %1696 = vst.msk [vmem:[%s255 + $0x38] sm:$0xff] %vm1688, %v1679
        %1697 = vst.msk [vmem:[%s255 + $0x40] sm:$0xff] %vm1688, %v1680
        %1698 = vst.msk [vmem:[%s255 + $0x48] sm:$0xff] %vm1688, %v1681
        %1699 = vst.msk [vmem:[%s255 + $0x50] sm:$0xff] %vm1688, %v1682
        %1700 = vst.msk [vmem:[%s255 + $0x58] sm:$0xff] %vm1688, %v1683
        %1701 = vst.msk [vmem:[%s255 + $0x60] sm:$0xff] %vm1688, %v1684
        %1702 = vst.msk [vmem:[%s255 + $0x68] sm:$0xff] %vm1688, %v1685
        %1703 = vst.msk [vmem:[%s255 + $0x70] sm:$0xff] %vm1688, %v1686
        %1704 = vst.msk [vmem:[%s255 + $0x78] sm:$0xff] %vm1688, %v1687
        %s1705 = sand.u32 %s154, 1
        %s1706 = scalar_lea.sflag [#allocation4], %s1705
        %s1707 = sand.u32 %s154, 1
        %s1708 = smul.addr %s1707, 128
        %s1709 = scalar_lea.vmem [#allocation5], %s1708
        // Predicated region
        $region45: #{tpu_custom_call.1} parent=39 // pred_check
          %p1710 = pneg %p164
        $region46: #{tpu_custom_call.1} parent=39 // pred_check_branch
          %1712 = sbr.rel (%p1710) target = $region48
        $region47: #{tpu_custom_call.1} parent=39 // pred_region
          %s1713 = smul.u32 16, %s25
          %s1715 = ssub.s32 2048, 2048
          %1716 = vsyncadd %s1706, %s1715
          %s1717 = smul.addr %s24, 32
          %s1718 = sadd.s32 %s1713, %s1717
          %s1719 = smul.addr %s1718, 128
          %s1720 = scalar_lea.hbm %s5, %s1719
          %s1721 = sshll.u32 %s1709, 4
          %s1722 = int_to_ptr.vmem [resolvable:$true] %s1721
          %1727 = dma.vmem_to_hbm [thread:$0]  %s1722, 2048, %s1720, %s1706, 128, 128, 8
        $region48: #{tpu_custom_call.1} parent=39 // pred_fallthru
          _
      $region40: #{tpu_custom_call.1} parent=5 // pred_fallthru
        _
      %p1728 = scmp.le.s32.totalorder 2, %s15
      // Predicated region
      $region49: #{tpu_custom_call.1} parent=5 // pred_check
        %p1729 = pneg %p1728
      $region50: #{tpu_custom_call.1} parent=5 // pred_check_branch
        %1731 = sbr.rel (%p1729) target = $region52
      $region51: #{tpu_custom_call.1} parent=5 // pred_region
        %s1732 = ssub.s32 %s15, 2
        // Predicated region
        $region53: #{tpu_custom_call.1} parent=51 // pred_check
          %p1733 = pneg %p170
        $region54: #{tpu_custom_call.1} parent=51 // pred_check_branch
          %1735 = sbr.rel (%p1733) target = $region56
        $region55: #{tpu_custom_call.1} parent=51 // pred_region
          %s1736 = sand.u32 %s155, 1
          %s1737 = scalar_lea.sflag [#allocation4], %s1736
          %s1738 = sand.u32 %s155, 1
          %s1739 = smul.addr %s1738, 128
          %s1740 = scalar_lea.vmem [#allocation5], %s1739
          %1741 = dma.done %s1737, 2048
        $region56: #{tpu_custom_call.1} parent=51 // pred_fallthru
          _
      $region52: #{tpu_custom_call.1} parent=5 // pred_fallthru
        _
    $region6: #{tpu_custom_call.1} parent=1 // loop_footer
      %s19 = sadd.s32 1, %s15
    $region7: #{tpu_custom_call.1} parent=1 // loop_footer_branch
      %14 = sbr.rel target = $region3
    $region8: #{tpu_custom_call.1} parent=1 // loop_exit
      _
    %1742 = vsyncpa [#allocation3], 1
    %s1743 = scalar_lea.sflag [#allocation3], 1
    %1744 = vsyncpa %s1743, 1
    %1745 = vsyncpa [#allocation4], 1
    %s1746 = scalar_lea.sflag [#allocation4], 1
    %1747 = vsyncpa %s1746, 1

</llo_original>
